<compile_context>
chip_gen: v5e
topology: v5e:2x2
jax: 0.10.0
libtpu: 0.0.40
codegen_flags: <defaults>
</compile_context>

<pallas_src>
import functools
import math

import jax
import jax.numpy as jnp
from jax import lax
from jax.experimental import pallas as pl
from jax.experimental.pallas import tpu as pltpu


def _round_up(x, m):
    return ((x + m - 1) // m) * m


def _head_slab(dout):
    """Lane-dense output slab: mean at [0, dout), cov at [cov_off, cov_off + dout)."""
    cov_off = max(64, _round_up(max(dout, 1), 64))
    return 2 * cov_off, cov_off


def _vmem_limit_bytes():
    # Raise the scoped VMEM limit (defaults are conservative); keep headroom below physical.
    try:
        cap = pltpu.get_tpu_info().vmem_capacity_bytes
    except Exception:
        cap = 64 * 1024 * 1024
    return int(min(96 * 1024 * 1024, max(cap - 16 * 1024 * 1024, 32 * 1024 * 1024)))


def _compiler_params():
    return pltpu.CompilerParams(
        dimension_semantics=("parallel",),          # batch grid -> megacore / 2-TC sharding
        vmem_limit_bytes=_vmem_limit_bytes(),
    )


# ----------------------------------------------------------------------------
# Single fused kernel: whole Decoder forward for one batch element per grid step.
# ----------------------------------------------------------------------------
def _decoder_kernel(r_ref, z_ref, tx_ref, wtp_ref, btp_ref,
                    w0r_ref, w0z_ref, w0t_ref, b0_ref, *rest,
                    n_mid, has_tail, first_relu, n_attn, num_heads, cov_off):
    f32 = jnp.float32
    out_ref = rest[-1]
    pos = 0

    # ---- target_projection ------------------------------------------------
    tx = jnp.dot(tx_ref[...], wtp_ref[...], preferred_element_type=f32) + btp_ref[...]

    # ---- first consumer of concat([r, z, tx]) via the pre-split 3H weight --
    h = (jnp.dot(r_ref[...], w0r_ref[...], preferred_element_type=f32)
         + jnp.dot(z_ref[...], w0z_ref[...], preferred_element_type=f32)
         + jnp.dot(tx, w0t_ref[...], preferred_element_type=f32)
         + b0_ref[...])
    if first_relu:
        h = jnp.maximum(h, 0.0)

    # ---- remaining relu MLP layers (static count) ---------------------------
    for _ in range(n_mid):
        w = rest[pos][...]
        b = rest[pos + 1][...]
        pos += 2
        h = jnp.maximum(jnp.dot(h, w, preferred_element_type=f32) + b, 0.0)

    # ---- hidden_projection (no activation) ----------------------------------
    if has_tail:
        w = rest[pos][...]
        b = rest[pos + 1][...]
        pos += 2
        h = jnp.dot(h, w, preferred_element_type=f32) + b

    T, H = h.shape
    d = H // num_heads
    scale = 1.0 / math.sqrt(d)

    # ---- self-attention stack (all layers, hidden stays in VMEM) ------------
    for _ in range(n_attn):
        w_qkv = rest[pos][...]        # (H, 3H) = [K | V | Q]
        wf_res = rest[pos + 1][...]   # (H, H)  final_linear, residual half
        wf_attn = rest[pos + 2][...]  # (H, H)  final_linear, attention half
        bf = rest[pos + 3][...]       # (1, H)
        gamma = rest[pos + 4][...]    # (1, H)
        beta = rest[pos + 5][...]     # (1, H)
        pos += 6

        x = h                                                         # residual == q == k == v
        qkv = jnp.dot(x, w_qkv, preferred_element_type=f32)           # (T, 3H), one MXU pass
        # final_linear(cat([residual, attn_out])) without materializing the (T, 2H) concat:
        res = jnp.dot(x, wf_res, preferred_element_type=f32) + bf     # residual half first

        for hh in range(num_heads):
            kh = qkv[:, hh * d:(hh + 1) * d]                          # (T, d)
            vh = qkv[:, H + hh * d:H + (hh + 1) * d]                  # (T, d)
            qh = qkv[:, 2 * H + hh * d:2 * H + (hh + 1) * d]          # (T, d)
            # q @ k^T (contract last dims -> no in-kernel transpose)
            s = lax.dot_general(qh, kh, (((1,), (1,)), ((), ())),
                                preferred_element_type=f32) * scale   # (T, T)
            s = s - jnp.max(s, axis=-1, keepdims=True)
            p = jnp.exp(s)
            p = p * pl.reciprocal(jnp.sum(p, axis=-1, keepdims=True), approx=True)
            oh = jnp.dot(p, vh, preferred_element_type=f32)           # (T, d)
            # accumulate this head's slice of the output projection (replaces head concat)
            res = res + jnp.dot(oh, wf_attn[hh * d:(hh + 1) * d, :],
                                preferred_element_type=f32)

        res = res + x                                                 # residual add

        # LayerNorm over last dim (eps = 1e-5, biased variance, affine)
        mu = jnp.mean(res, axis=-1, keepdims=True)
        var = jnp.mean(jnp.square(res - mu), axis=-1, keepdims=True)
        h = (res - mu) * lax.rsqrt(var + 1e-5) * gamma + beta

    # ---- fused mean / cov heads: lane-dense slab ----------------------------
    w_heads = rest[pos][...]          # (H, slab)
    b_heads = rest[pos + 1][...]      # (1, slab)
    y = jnp.dot(h, w_heads, preferred_element_type=f32) + b_heads     # (T, slab)
    # torch.nn.Softplus(beta=1, threshold=20): x if x > 20 else log(1 + exp(x))
    sp = jnp.where(y > 20.0, y, jnp.log1p(jnp.exp(jnp.minimum(y, 20.0))))
    lane = lax.broadcasted_iota(jnp.int32, y.shape, 1)
    out_ref[...] = jnp.where(lane >= cov_off, sp, y)


# ----------------------------------------------------------------------------
# Wrapper: one pallas_call for the entire Decoder forward.
# ----------------------------------------------------------------------------
def decoder_forward(r, z, target_x, params, config):
    B, T, H = r.shape
    Din = target_x.shape[-1]
    Dout = config["l2_output_dim"]
    num_heads = config["num_heads"]
    slab, cov_off = _head_slab(Dout)

    wtp, btp = params["target_proj"]
    w0r, w0z, w0t, b0 = params["first"]
    mids = params["mids"]
    tail = params["tail"]
    attn = params["attn"]
    w_heads, b_heads = params["heads"]

    inputs = [r, z, target_x, wtp, btp, w0r, w0z, w0t, b0]
    for (w, b) in mids:
        inputs += [w, b]
    if tail is not None:
        inputs += [tail[0], tail[1]]
    for layer in attn:
        inputs += list(layer)
    inputs += [w_heads, b_heads]

    def weight_spec(a):
        return pl.BlockSpec(a.shape, lambda bb: (0, 0))

    in_specs = [
        pl.BlockSpec((None, T, H), lambda bb: (bb, 0, 0)),      # r   (squeezed batch dim)
        pl.BlockSpec((None, T, H), lambda bb: (bb, 0, 0)),      # z
        pl.BlockSpec((None, T, Din), lambda bb: (bb, 0, 0)),    # target_x
    ] + [weight_spec(a) for a in inputs[3:]]                    # resident weights / biases

    kernel = functools.partial(
        _decoder_kernel,
        n_mid=len(mids),
        has_tail=tail is not None,
        first_relu=tail is not None,     # first consumer is a relu MLP layer iff hidden_layers >= 2
        n_attn=len(attn),
        num_heads=num_heads,
        cov_off=cov_off,
    )

    out = pl.pallas_call(
        kernel,
        out_shape=jax.ShapeDtypeStruct((B, T, slab), jnp.float32),
        grid=(B,),
        in_specs=in_specs,
        out_specs=pl.BlockSpec((None, T, slab), lambda bb: (bb, 0, 0)),
        compiler_params=_compiler_params(),
    )(*inputs)

    mean = out[:, :, :Dout]
    cov = out[:, :, cov_off:cov_off + Dout]
    return mean, cov


# ----------------------------------------------------------------------------
# Parameter init: deterministic, mirrors the module's shapes; all kernel-ready
# weight plumbing (splits / concats / head slab) is done HERE, not per forward.
# ----------------------------------------------------------------------------
def init_decoder_params(key, config):
    H = config["hidden_dim"]
    Din = config["l2_input_dim"]
    Dout = config["l2_output_dim"]
    HL = config["hidden_layers"]
    AL = config["attention_layers"]
    slab, cov_off = _head_slab(Dout)

    n_keys = max(32, 2 * HL + 6 * AL + 16)
    keys = iter(jax.random.split(key, n_keys))

    def lin(in_dim, out_dim, gain=1.0, bias=True):
        bound = gain * math.sqrt(6.0 / (in_dim + out_dim))        # xavier_uniform
        w = jax.random.uniform(next(keys), (in_dim, out_dim), jnp.float32, -bound, bound)
        if bias:
            bb = 1.0 / math.sqrt(in_dim)
            b = jax.random.uniform(next(keys), (1, out_dim), jnp.float32, -bb, bb)
        else:
            b = jnp.zeros((1, out_dim), jnp.float32)
        return w, b

    params = {}
    params["target_proj"] = lin(Din, H)

    mlp = [lin(3 * H, 3 * H, gain=math.sqrt(2.0)) for _ in range(HL - 1)]
    whp, bhp = lin(3 * H, H)
    if mlp:                                   # first relu MLP layer consumes the [r|z|tx] concat
        w0, b0 = mlp[0]
        params["first"] = (w0[:H], w0[H:2 * H], w0[2 * H:], b0)
        params["mids"] = mlp[1:]
        params["tail"] = (whp, bhp)
    else:                                     # hidden_projection consumes the concat directly
        params["first"] = (whp[:H], whp[H:2 * H], whp[2 * H:], bhp)
        params["mids"] = []
        params["tail"] = None

    attn = []
    for _ in range(AL):
        wk, _ = lin(H, H, bias=False)
        wv, _ = lin(H, H, bias=False)
        wq, _ = lin(H, H, bias=False)
        wf, bf = lin(2 * H, H)
        w_qkv = jnp.concatenate([wk, wv, wq], axis=1)     # fused (H, 3H) = [K | V | Q]
        attn.append((w_qkv, wf[:H], wf[H:], bf,
                     jnp.ones((1, H), jnp.float32), jnp.zeros((1, H), jnp.float32)))
    params["attn"] = attn

    # fused mean/cov head weights packed into one lane-dense (H, slab) slab
    wm, bm = lin(H, Dout)
    wc, bc = lin(H, Dout)
    w_heads = jnp.zeros((H, slab), jnp.float32)
    w_heads = w_heads.at[:, :Dout].set(wm).at[:, cov_off:cov_off + Dout].set(wc)
    b_heads = jnp.zeros((1, slab), jnp.float32)
    b_heads = b_heads.at[:, :Dout].set(bm).at[:, cov_off:cov_off + Dout].set(bc)
    params["heads"] = (w_heads, b_heads)
    return params


if __name__ == "__main__":
    config = dict(
        hidden_dim=32,
        num_heads=2,
        dropout=0.0,
        l2_input_dim=6,
        l2_output_dim=3,
        hidden_layers=3,      # -> 2 relu linears of size (3H, 3H)
        attention_layers=2,
    )
    B, T = 2, 8

    key = jax.random.PRNGKey(0)
    kp, kr, kz, kx = jax.random.split(key, 4)
    params = init_decoder_params(kp, config)

    r = jax.random.normal(kr, (B, T, config["hidden_dim"]), jnp.float32)
    z = jax.random.normal(kz, (B, T, config["hidden_dim"]), jnp.float32)
    target_x = jax.random.normal(kx, (B, T, config["l2_input_dim"]), jnp.float32)

    mean, cov = decoder_forward(r, z, target_x, params, config)
    jax.block_until_ready((mean, cov))
    assert mean.shape == (B, T, config["l2_output_dim"])
    assert cov.shape == (B, T, config["l2_output_dim"])
    assert bool(jnp.all(cov > 0.0))   # softplus output must be positive
    print("KERNEL_OK")
</pallas_src>

<mosaic_0001>
module attributes {stable_mosaic.version = 11 : i64} {
  func.func @_decoder_kernel(%arg0: i32, %arg1: memref<1x8x32xf32, #tpu.memory_space<vmem>>, %arg2: memref<1x8x32xf32, #tpu.memory_space<vmem>>, %arg3: memref<1x8x6xf32, #tpu.memory_space<vmem>>, %arg4: memref<6x32xf32, #tpu.memory_space<vmem>>, %arg5: memref<1x32xf32, #tpu.memory_space<vmem>>, %arg6: memref<32x96xf32, #tpu.memory_space<vmem>>, %arg7: memref<32x96xf32, #tpu.memory_space<vmem>>, %arg8: memref<32x96xf32, #tpu.memory_space<vmem>>, %arg9: memref<1x96xf32, #tpu.memory_space<vmem>>, %arg10: memref<96x96xf32, #tpu.memory_space<vmem>>, %arg11: memref<1x96xf32, #tpu.memory_space<vmem>>, %arg12: memref<96x32xf32, #tpu.memory_space<vmem>>, %arg13: memref<1x32xf32, #tpu.memory_space<vmem>>, %arg14: memref<32x96xf32, #tpu.memory_space<vmem>>, %arg15: memref<32x32xf32, #tpu.memory_space<vmem>>, %arg16: memref<32x32xf32, #tpu.memory_space<vmem>>, %arg17: memref<1x32xf32, #tpu.memory_space<vmem>>, %arg18: memref<1x32xf32, #tpu.memory_space<vmem>>, %arg19: memref<1x32xf32, #tpu.memory_space<vmem>>, %arg20: memref<32x96xf32, #tpu.memory_space<vmem>>, %arg21: memref<32x32xf32, #tpu.memory_space<vmem>>, %arg22: memref<32x32xf32, #tpu.memory_space<vmem>>, %arg23: memref<1x32xf32, #tpu.memory_space<vmem>>, %arg24: memref<1x32xf32, #tpu.memory_space<vmem>>, %arg25: memref<1x32xf32, #tpu.memory_space<vmem>>, %arg26: memref<32x128xf32, #tpu.memory_space<vmem>>, %arg27: memref<1x128xf32, #tpu.memory_space<vmem>>, %arg28: memref<1x8x128xf32, #tpu.memory_space<vmem>>) attributes {dimension_semantics = [#tpu.dimension_semantics<parallel>], iteration_bounds = array<i64: 2>, scalar_prefetch = 0 : i64, scratch_operands = 0 : i64, tpu.core_type = #tpu.core_type<tc>, window_params = [{transform_indices = @transform_0, window_bounds = array<i64: 1, 8, 32>}, {transform_indices = @transform_1, window_bounds = array<i64: 1, 8, 32>}, {transform_indices = @transform_2, window_bounds = array<i64: 1, 8, 6>}, {pipeline_mode = #tpu.pipeline_mode<synchronous>, transform_indices = @transform_3, window_bounds = array<i64: 6, 32>}, {pipeline_mode = #tpu.pipeline_mode<synchronous>, transform_indices = @transform_4, window_bounds = array<i64: 1, 32>}, {pipeline_mode = #tpu.pipeline_mode<synchronous>, transform_indices = @transform_5, window_bounds = array<i64: 32, 96>}, {pipeline_mode = #tpu.pipeline_mode<synchronous>, transform_indices = @transform_6, window_bounds = array<i64: 32, 96>}, {pipeline_mode = #tpu.pipeline_mode<synchronous>, transform_indices = @transform_7, window_bounds = array<i64: 32, 96>}, {pipeline_mode = #tpu.pipeline_mode<synchronous>, transform_indices = @transform_8, window_bounds = array<i64: 1, 96>}, {pipeline_mode = #tpu.pipeline_mode<synchronous>, transform_indices = @transform_9, window_bounds = array<i64: 96, 96>}, {pipeline_mode = #tpu.pipeline_mode<synchronous>, transform_indices = @transform_10, window_bounds = array<i64: 1, 96>}, {pipeline_mode = #tpu.pipeline_mode<synchronous>, transform_indices = @transform_11, window_bounds = array<i64: 96, 32>}, {pipeline_mode = #tpu.pipeline_mode<synchronous>, transform_indices = @transform_12, window_bounds = array<i64: 1, 32>}, {pipeline_mode = #tpu.pipeline_mode<synchronous>, transform_indices = @transform_13, window_bounds = array<i64: 32, 96>}, {pipeline_mode = #tpu.pipeline_mode<synchronous>, transform_indices = @transform_14, window_bounds = array<i64: 32, 32>}, {pipeline_mode = #tpu.pipeline_mode<synchronous>, transform_indices = @transform_15, window_bounds = array<i64: 32, 32>}, {pipeline_mode = #tpu.pipeline_mode<synchronous>, transform_indices = @transform_16, window_bounds = array<i64: 1, 32>}, {pipeline_mode = #tpu.pipeline_mode<synchronous>, transform_indices = @transform_17, window_bounds = array<i64: 1, 32>}, {pipeline_mode = #tpu.pipeline_mode<synchronous>, transform_indices = @transform_18, window_bounds = array<i64: 1, 32>}, {pipeline_mode = #tpu.pipeline_mode<synchronous>, transform_indices = @transform_19, window_bounds = array<i64: 32, 96>}, {pipeline_mode = #tpu.pipeline_mode<synchronous>, transform_indices = @transform_20, window_bounds = array<i64: 32, 32>}, {pipeline_mode = #tpu.pipeline_mode<synchronous>, transform_indices = @transform_21, window_bounds = array<i64: 32, 32>}, {pipeline_mode = #tpu.pipeline_mode<synchronous>, transform_indices = @transform_22, window_bounds = array<i64: 1, 32>}, {pipeline_mode = #tpu.pipeline_mode<synchronous>, transform_indices = @transform_23, window_bounds = array<i64: 1, 32>}, {pipeline_mode = #tpu.pipeline_mode<synchronous>, transform_indices = @transform_24, window_bounds = array<i64: 1, 32>}, {pipeline_mode = #tpu.pipeline_mode<synchronous>, transform_indices = @transform_25, window_bounds = array<i64: 32, 128>}, {pipeline_mode = #tpu.pipeline_mode<synchronous>, transform_indices = @transform_26, window_bounds = array<i64: 1, 128>}, {transform_indices = @transform_27, window_bounds = array<i64: 1, 8, 128>}]} {
    %c0 = arith.constant 0 : index
    %c0_0 = arith.constant 0 : index
    %c0_1 = arith.constant 0 : index
    %0 = vector.load %arg3[%c0, %c0_0, %c0_1] : memref<1x8x6xf32, #tpu.memory_space<vmem>>, vector<1x8x6xf32>
    %1 = vector.shape_cast %0 : vector<1x8x6xf32> to vector<8x6xf32>
    %c0_2 = arith.constant 0 : index
    %c0_3 = arith.constant 0 : index
    %2 = vector.load %arg4[%c0_2, %c0_3] : memref<6x32xf32, #tpu.memory_space<vmem>>, vector<6x32xf32>
    %cst = arith.constant dense<0.000000e+00> : vector<8x32xf32>
    %3 = tpu.matmul %1, %2, %cst {dimension_numbers = #tpu.dot_dimension_numbers<[1], [0], [0], [1], [0, 0, 1, 1], [], []>} : vector<8x6xf32>, vector<6x32xf32>, vector<8x32xf32> -> vector<8x32xf32>
    %c0_4 = arith.constant 0 : index
    %c0_5 = arith.constant 0 : index
    %4 = vector.load %arg5[%c0_4, %c0_5] : memref<1x32xf32, #tpu.memory_space<vmem>>, vector<1x32xf32>
    %5 = vector.broadcast %4 : vector<1x32xf32> to vector<8x32xf32>
    %6 = arith.addf %3, %5 : vector<8x32xf32>
    %c0_6 = arith.constant 0 : index
    %c0_7 = arith.constant 0 : index
    %c0_8 = arith.constant 0 : index
    %7 = vector.load %arg1[%c0_6, %c0_7, %c0_8] : memref<1x8x32xf32, #tpu.memory_space<vmem>>, vector<1x8x32xf32>
    %8 = vector.shape_cast %7 : vector<1x8x32xf32> to vector<8x32xf32>
    %c0_9 = arith.constant 0 : index
    %c0_10 = arith.constant 0 : index
    %9 = vector.load %arg6[%c0_9, %c0_10] : memref<32x96xf32, #tpu.memory_space<vmem>>, vector<32x96xf32>
    %cst_11 = arith.constant dense<0.000000e+00> : vector<8x96xf32>
    %10 = tpu.matmul %8, %9, %cst_11 {dimension_numbers = #tpu.dot_dimension_numbers<[1], [0], [0], [1], [0, 0, 1, 1], [], []>} : vector<8x32xf32>, vector<32x96xf32>, vector<8x96xf32> -> vector<8x96xf32>
    %c0_12 = arith.constant 0 : index
    %c0_13 = arith.constant 0 : index
    %c0_14 = arith.constant 0 : index
    %11 = vector.load %arg2[%c0_12, %c0_13, %c0_14] : memref<1x8x32xf32, #tpu.memory_space<vmem>>, vector<1x8x32xf32>
    %12 = vector.shape_cast %11 : vector<1x8x32xf32> to vector<8x32xf32>
    %c0_15 = arith.constant 0 : index
    %c0_16 = arith.constant 0 : index
    %13 = vector.load %arg7[%c0_15, %c0_16] : memref<32x96xf32, #tpu.memory_space<vmem>>, vector<32x96xf32>
    %cst_17 = arith.constant dense<0.000000e+00> : vector<8x96xf32>
    %14 = tpu.matmul %12, %13, %cst_17 {dimension_numbers = #tpu.dot_dimension_numbers<[1], [0], [0], [1], [0, 0, 1, 1], [], []>} : vector<8x32xf32>, vector<32x96xf32>, vector<8x96xf32> -> vector<8x96xf32>
    %15 = arith.addf %10, %14 : vector<8x96xf32>
    %c0_18 = arith.constant 0 : index
    %c0_19 = arith.constant 0 : index
    %16 = vector.load %arg8[%c0_18, %c0_19] : memref<32x96xf32, #tpu.memory_space<vmem>>, vector<32x96xf32>
    %cst_20 = arith.constant dense<0.000000e+00> : vector<8x96xf32>
    %17 = tpu.matmul %6, %16, %cst_20 {dimension_numbers = #tpu.dot_dimension_numbers<[1], [0], [0], [1], [0, 0, 1, 1], [], []>} : vector<8x32xf32>, vector<32x96xf32>, vector<8x96xf32> -> vector<8x96xf32>
    %18 = arith.addf %15, %17 : vector<8x96xf32>
    %c0_21 = arith.constant 0 : index
    %c0_22 = arith.constant 0 : index
    %19 = vector.load %arg9[%c0_21, %c0_22] : memref<1x96xf32, #tpu.memory_space<vmem>>, vector<1x96xf32>
    %20 = vector.broadcast %19 : vector<1x96xf32> to vector<8x96xf32>
    %21 = arith.addf %18, %20 : vector<8x96xf32>
    %cst_23 = arith.constant 0.000000e+00 : f32
    %22 = vector.broadcast %cst_23 : f32 to vector<8x96xf32>
    %23 = arith.maximumf %21, %22 : vector<8x96xf32>
    %c0_24 = arith.constant 0 : index
    %c0_25 = arith.constant 0 : index
    %24 = vector.load %arg10[%c0_24, %c0_25] : memref<96x96xf32, #tpu.memory_space<vmem>>, vector<96x96xf32>
    %c0_26 = arith.constant 0 : index
    %c0_27 = arith.constant 0 : index
    %25 = vector.load %arg11[%c0_26, %c0_27] : memref<1x96xf32, #tpu.memory_space<vmem>>, vector<1x96xf32>
    %cst_28 = arith.constant dense<0.000000e+00> : vector<8x96xf32>
    %26 = tpu.matmul %23, %24, %cst_28 {dimension_numbers = #tpu.dot_dimension_numbers<[1], [0], [0], [1], [0, 0, 1, 1], [], []>} : vector<8x96xf32>, vector<96x96xf32>, vector<8x96xf32> -> vector<8x96xf32>
    %27 = vector.broadcast %25 : vector<1x96xf32> to vector<8x96xf32>
    %28 = arith.addf %26, %27 : vector<8x96xf32>
    %cst_29 = arith.constant 0.000000e+00 : f32
    %29 = vector.broadcast %cst_29 : f32 to vector<8x96xf32>
    %30 = arith.maximumf %28, %29 : vector<8x96xf32>
    %c0_30 = arith.constant 0 : index
    %c0_31 = arith.constant 0 : index
    %31 = vector.load %arg12[%c0_30, %c0_31] : memref<96x32xf32, #tpu.memory_space<vmem>>, vector<96x32xf32>
    %c0_32 = arith.constant 0 : index
    %c0_33 = arith.constant 0 : index
    %32 = vector.load %arg13[%c0_32, %c0_33] : memref<1x32xf32, #tpu.memory_space<vmem>>, vector<1x32xf32>
    %cst_34 = arith.constant dense<0.000000e+00> : vector<8x32xf32>
    %33 = tpu.matmul %30, %31, %cst_34 {dimension_numbers = #tpu.dot_dimension_numbers<[1], [0], [0], [1], [0, 0, 1, 1], [], []>} : vector<8x96xf32>, vector<96x32xf32>, vector<8x32xf32> -> vector<8x32xf32>
    %34 = vector.broadcast %32 : vector<1x32xf32> to vector<8x32xf32>
    %35 = arith.addf %33, %34 : vector<8x32xf32>
    %c0_35 = arith.constant 0 : index
    %c0_36 = arith.constant 0 : index
    %36 = vector.load %arg14[%c0_35, %c0_36] : memref<32x96xf32, #tpu.memory_space<vmem>>, vector<32x96xf32>
    %c0_37 = arith.constant 0 : index
    %c0_38 = arith.constant 0 : index
    %37 = vector.load %arg15[%c0_37, %c0_38] : memref<32x32xf32, #tpu.memory_space<vmem>>, vector<32x32xf32>
    %c0_39 = arith.constant 0 : index
    %c0_40 = arith.constant 0 : index
    %38 = vector.load %arg16[%c0_39, %c0_40] : memref<32x32xf32, #tpu.memory_space<vmem>>, vector<32x32xf32>
    %c0_41 = arith.constant 0 : index
    %c0_42 = arith.constant 0 : index
    %39 = vector.load %arg17[%c0_41, %c0_42] : memref<1x32xf32, #tpu.memory_space<vmem>>, vector<1x32xf32>
    %c0_43 = arith.constant 0 : index
    %c0_44 = arith.constant 0 : index
    %40 = vector.load %arg18[%c0_43, %c0_44] : memref<1x32xf32, #tpu.memory_space<vmem>>, vector<1x32xf32>
    %c0_45 = arith.constant 0 : index
    %c0_46 = arith.constant 0 : index
    %41 = vector.load %arg19[%c0_45, %c0_46] : memref<1x32xf32, #tpu.memory_space<vmem>>, vector<1x32xf32>
    %cst_47 = arith.constant dense<0.000000e+00> : vector<8x96xf32>
    %42 = tpu.matmul %35, %36, %cst_47 {dimension_numbers = #tpu.dot_dimension_numbers<[1], [0], [0], [1], [0, 0, 1, 1], [], []>} : vector<8x32xf32>, vector<32x96xf32>, vector<8x96xf32> -> vector<8x96xf32>
    %cst_48 = arith.constant dense<0.000000e+00> : vector<8x32xf32>
    %43 = tpu.matmul %35, %37, %cst_48 {dimension_numbers = #tpu.dot_dimension_numbers<[1], [0], [0], [1], [0, 0, 1, 1], [], []>} : vector<8x32xf32>, vector<32x32xf32>, vector<8x32xf32> -> vector<8x32xf32>
    %44 = vector.broadcast %39 : vector<1x32xf32> to vector<8x32xf32>
    %45 = arith.addf %43, %44 : vector<8x32xf32>
    %46 = vector.extract_strided_slice %42 {offsets = [0, 0], sizes = [8, 16], strides = [1, 1]} : vector<8x96xf32> to vector<8x16xf32>
    %47 = vector.extract_strided_slice %42 {offsets = [0, 32], sizes = [8, 16], strides = [1, 1]} : vector<8x96xf32> to vector<8x16xf32>
    %48 = vector.extract_strided_slice %42 {offsets = [0, 64], sizes = [8, 16], strides = [1, 1]} : vector<8x96xf32> to vector<8x16xf32>
    %cst_49 = arith.constant dense<0.000000e+00> : vector<8x8xf32>
    %49 = tpu.matmul %48, %46, %cst_49 {dimension_numbers = #tpu.dot_dimension_numbers<[1], [1], [0], [0], [0, 0, 1, 0], [], []>} : vector<8x16xf32>, vector<8x16xf32>, vector<8x8xf32> -> vector<8x8xf32>
    %cst_50 = arith.constant 2.500000e-01 : f32
    %50 = vector.broadcast %cst_50 : f32 to vector<8x8xf32>
    %51 = arith.mulf %49, %50 : vector<8x8xf32>
    %cst_51 = arith.constant dense<0xFF800000> : vector<8xf32>
    %52 = vector.multi_reduction <maximumf>, %51, %cst_51 [1] : vector<8x8xf32> to vector<8xf32>
    %53 = vector.shape_cast %52 : vector<8xf32> to vector<8x1xf32>
    %54 = vector.broadcast %53 : vector<8x1xf32> to vector<8x8xf32>
    %55 = arith.subf %51, %54 : vector<8x8xf32>
    %56 = math.exp %55 : vector<8x8xf32>
    %cst_52 = arith.constant dense<0.000000e+00> : vector<8xf32>
    %57 = vector.multi_reduction <add>, %56, %cst_52 [1] : vector<8x8xf32> to vector<8xf32>
    %58 = vector.shape_cast %57 : vector<8xf32> to vector<8x1xf32>
    %59 = tpu.reciprocal %58 {approx = true} : vector<8x1xf32> -> vector<8x1xf32>
    %60 = vector.broadcast %59 : vector<8x1xf32> to vector<8x8xf32>
    %61 = arith.mulf %56, %60 : vector<8x8xf32>
    %cst_53 = arith.constant dense<0.000000e+00> : vector<8x16xf32>
    %62 = tpu.matmul %61, %47, %cst_53 {dimension_numbers = #tpu.dot_dimension_numbers<[1], [0], [0], [1], [0, 0, 1, 1], [], []>} : vector<8x8xf32>, vector<8x16xf32>, vector<8x16xf32> -> vector<8x16xf32>
    %63 = vector.extract_strided_slice %38 {offsets = [0, 0], sizes = [16, 32], strides = [1, 1]} : vector<32x32xf32> to vector<16x32xf32>
    %cst_54 = arith.constant dense<0.000000e+00> : vector<8x32xf32>
    %64 = tpu.matmul %62, %63, %cst_54 {dimension_numbers = #tpu.dot_dimension_numbers<[1], [0], [0], [1], [0, 0, 1, 1], [], []>} : vector<8x16xf32>, vector<16x32xf32>, vector<8x32xf32> -> vector<8x32xf32>
    %65 = arith.addf %45, %64 : vector<8x32xf32>
    %66 = vector.extract_strided_slice %42 {offsets = [0, 16], sizes = [8, 16], strides = [1, 1]} : vector<8x96xf32> to vector<8x16xf32>
    %67 = vector.extract_strided_slice %42 {offsets = [0, 48], sizes = [8, 16], strides = [1, 1]} : vector<8x96xf32> to vector<8x16xf32>
    %68 = vector.extract_strided_slice %42 {offsets = [0, 80], sizes = [8, 16], strides = [1, 1]} : vector<8x96xf32> to vector<8x16xf32>
    %cst_55 = arith.constant dense<0.000000e+00> : vector<8x8xf32>
    %69 = tpu.matmul %68, %66, %cst_55 {dimension_numbers = #tpu.dot_dimension_numbers<[1], [1], [0], [0], [0, 0, 1, 0], [], []>} : vector<8x16xf32>, vector<8x16xf32>, vector<8x8xf32> -> vector<8x8xf32>
    %cst_56 = arith.constant 2.500000e-01 : f32
    %70 = vector.broadcast %cst_56 : f32 to vector<8x8xf32>
    %71 = arith.mulf %69, %70 : vector<8x8xf32>
    %cst_57 = arith.constant dense<0xFF800000> : vector<8xf32>
    %72 = vector.multi_reduction <maximumf>, %71, %cst_57 [1] : vector<8x8xf32> to vector<8xf32>
    %73 = vector.shape_cast %72 : vector<8xf32> to vector<8x1xf32>
    %74 = vector.broadcast %73 : vector<8x1xf32> to vector<8x8xf32>
    %75 = arith.subf %71, %74 : vector<8x8xf32>
    %76 = math.exp %75 : vector<8x8xf32>
    %cst_58 = arith.constant dense<0.000000e+00> : vector<8xf32>
    %77 = vector.multi_reduction <add>, %76, %cst_58 [1] : vector<8x8xf32> to vector<8xf32>
    %78 = vector.shape_cast %77 : vector<8xf32> to vector<8x1xf32>
    %79 = tpu.reciprocal %78 {approx = true} : vector<8x1xf32> -> vector<8x1xf32>
    %80 = vector.broadcast %79 : vector<8x1xf32> to vector<8x8xf32>
    %81 = arith.mulf %76, %80 : vector<8x8xf32>
    %cst_59 = arith.constant dense<0.000000e+00> : vector<8x16xf32>
    %82 = tpu.matmul %81, %67, %cst_59 {dimension_numbers = #tpu.dot_dimension_numbers<[1], [0], [0], [1], [0, 0, 1, 1], [], []>} : vector<8x8xf32>, vector<8x16xf32>, vector<8x16xf32> -> vector<8x16xf32>
    %83 = vector.extract_strided_slice %38 {offsets = [16, 0], sizes = [16, 32], strides = [1, 1]} : vector<32x32xf32> to vector<16x32xf32>
    %cst_60 = arith.constant dense<0.000000e+00> : vector<8x32xf32>
    %84 = tpu.matmul %82, %83, %cst_60 {dimension_numbers = #tpu.dot_dimension_numbers<[1], [0], [0], [1], [0, 0, 1, 1], [], []>} : vector<8x16xf32>, vector<16x32xf32>, vector<8x32xf32> -> vector<8x32xf32>
    %85 = arith.addf %65, %84 : vector<8x32xf32>
    %86 = arith.addf %85, %35 : vector<8x32xf32>
    %cst_61 = arith.constant dense<0.000000e+00> : vector<8xf32>
    %87 = vector.multi_reduction <add>, %86, %cst_61 [1] : vector<8x32xf32> to vector<8xf32>
    %88 = vector.shape_cast %87 : vector<8xf32> to vector<8x1xf32>
    %cst_62 = arith.constant 3.200000e+01 : f32
    %89 = vector.broadcast %cst_62 : f32 to vector<8x1xf32>
    %90 = arith.divf %88, %89 : vector<8x1xf32>
    %91 = vector.broadcast %90 : vector<8x1xf32> to vector<8x32xf32>
    %92 = arith.subf %86, %91 : vector<8x32xf32>
    %93 = arith.mulf %92, %92 : vector<8x32xf32>
    %cst_63 = arith.constant dense<0.000000e+00> : vector<8xf32>
    %94 = vector.multi_reduction <add>, %93, %cst_63 [1] : vector<8x32xf32> to vector<8xf32>
    %95 = vector.shape_cast %94 : vector<8xf32> to vector<8x1xf32>
    %cst_64 = arith.constant 3.200000e+01 : f32
    %96 = vector.broadcast %cst_64 : f32 to vector<8x1xf32>
    %97 = arith.divf %95, %96 : vector<8x1xf32>
    %98 = vector.broadcast %90 : vector<8x1xf32> to vector<8x32xf32>
    %99 = arith.subf %86, %98 : vector<8x32xf32>
    %cst_65 = arith.constant 9.99999974E-6 : f32
    %100 = vector.broadcast %cst_65 : f32 to vector<8x1xf32>
    %101 = arith.addf %97, %100 : vector<8x1xf32>
    %102 = math.rsqrt %101 : vector<8x1xf32>
    %103 = vector.broadcast %102 : vector<8x1xf32> to vector<8x32xf32>
    %104 = arith.mulf %99, %103 : vector<8x32xf32>
    %105 = vector.broadcast %40 : vector<1x32xf32> to vector<8x32xf32>
    %106 = arith.mulf %104, %105 : vector<8x32xf32>
    %107 = vector.broadcast %41 : vector<1x32xf32> to vector<8x32xf32>
    %108 = arith.addf %106, %107 : vector<8x32xf32>
    %c0_66 = arith.constant 0 : index
    %c0_67 = arith.constant 0 : index
    %109 = vector.load %arg20[%c0_66, %c0_67] : memref<32x96xf32, #tpu.memory_space<vmem>>, vector<32x96xf32>
    %c0_68 = arith.constant 0 : index
    %c0_69 = arith.constant 0 : index
    %110 = vector.load %arg21[%c0_68, %c0_69] : memref<32x32xf32, #tpu.memory_space<vmem>>, vector<32x32xf32>
    %c0_70 = arith.constant 0 : index
    %c0_71 = arith.constant 0 : index
    %111 = vector.load %arg22[%c0_70, %c0_71] : memref<32x32xf32, #tpu.memory_space<vmem>>, vector<32x32xf32>
    %c0_72 = arith.constant 0 : index
    %c0_73 = arith.constant 0 : index
    %112 = vector.load %arg23[%c0_72, %c0_73] : memref<1x32xf32, #tpu.memory_space<vmem>>, vector<1x32xf32>
    %c0_74 = arith.constant 0 : index
    %c0_75 = arith.constant 0 : index
    %113 = vector.load %arg24[%c0_74, %c0_75] : memref<1x32xf32, #tpu.memory_space<vmem>>, vector<1x32xf32>
    %c0_76 = arith.constant 0 : index
    %c0_77 = arith.constant 0 : index
    %114 = vector.load %arg25[%c0_76, %c0_77] : memref<1x32xf32, #tpu.memory_space<vmem>>, vector<1x32xf32>
    %cst_78 = arith.constant dense<0.000000e+00> : vector<8x96xf32>
    %115 = tpu.matmul %108, %109, %cst_78 {dimension_numbers = #tpu.dot_dimension_numbers<[1], [0], [0], [1], [0, 0, 1, 1], [], []>} : vector<8x32xf32>, vector<32x96xf32>, vector<8x96xf32> -> vector<8x96xf32>
    %cst_79 = arith.constant dense<0.000000e+00> : vector<8x32xf32>
    %116 = tpu.matmul %108, %110, %cst_79 {dimension_numbers = #tpu.dot_dimension_numbers<[1], [0], [0], [1], [0, 0, 1, 1], [], []>} : vector<8x32xf32>, vector<32x32xf32>, vector<8x32xf32> -> vector<8x32xf32>
    %117 = vector.broadcast %112 : vector<1x32xf32> to vector<8x32xf32>
    %118 = arith.addf %116, %117 : vector<8x32xf32>
    %119 = vector.extract_strided_slice %115 {offsets = [0, 0], sizes = [8, 16], strides = [1, 1]} : vector<8x96xf32> to vector<8x16xf32>
    %120 = vector.extract_strided_slice %115 {offsets = [0, 32], sizes = [8, 16], strides = [1, 1]} : vector<8x96xf32> to vector<8x16xf32>
    %121 = vector.extract_strided_slice %115 {offsets = [0, 64], sizes = [8, 16], strides = [1, 1]} : vector<8x96xf32> to vector<8x16xf32>
    %cst_80 = arith.constant dense<0.000000e+00> : vector<8x8xf32>
    %122 = tpu.matmul %121, %119, %cst_80 {dimension_numbers = #tpu.dot_dimension_numbers<[1], [1], [0], [0], [0, 0, 1, 0], [], []>} : vector<8x16xf32>, vector<8x16xf32>, vector<8x8xf32> -> vector<8x8xf32>
    %cst_81 = arith.constant 2.500000e-01 : f32
    %123 = vector.broadcast %cst_81 : f32 to vector<8x8xf32>
    %124 = arith.mulf %122, %123 : vector<8x8xf32>
    %cst_82 = arith.constant dense<0xFF800000> : vector<8xf32>
    %125 = vector.multi_reduction <maximumf>, %124, %cst_82 [1] : vector<8x8xf32> to vector<8xf32>
    %126 = vector.shape_cast %125 : vector<8xf32> to vector<8x1xf32>
    %127 = vector.broadcast %126 : vector<8x1xf32> to vector<8x8xf32>
    %128 = arith.subf %124, %127 : vector<8x8xf32>
    %129 = math.exp %128 : vector<8x8xf32>
    %cst_83 = arith.constant dense<0.000000e+00> : vector<8xf32>
    %130 = vector.multi_reduction <add>, %129, %cst_83 [1] : vector<8x8xf32> to vector<8xf32>
    %131 = vector.shape_cast %130 : vector<8xf32> to vector<8x1xf32>
    %132 = tpu.reciprocal %131 {approx = true} : vector<8x1xf32> -> vector<8x1xf32>
    %133 = vector.broadcast %132 : vector<8x1xf32> to vector<8x8xf32>
    %134 = arith.mulf %129, %133 : vector<8x8xf32>
    %cst_84 = arith.constant dense<0.000000e+00> : vector<8x16xf32>
    %135 = tpu.matmul %134, %120, %cst_84 {dimension_numbers = #tpu.dot_dimension_numbers<[1], [0], [0], [1], [0, 0, 1, 1], [], []>} : vector<8x8xf32>, vector<8x16xf32>, vector<8x16xf32> -> vector<8x16xf32>
    %136 = vector.extract_strided_slice %111 {offsets = [0, 0], sizes = [16, 32], strides = [1, 1]} : vector<32x32xf32> to vector<16x32xf32>
    %cst_85 = arith.constant dense<0.000000e+00> : vector<8x32xf32>
    %137 = tpu.matmul %135, %136, %cst_85 {dimension_numbers = #tpu.dot_dimension_numbers<[1], [0], [0], [1], [0, 0, 1, 1], [], []>} : vector<8x16xf32>, vector<16x32xf32>, vector<8x32xf32> -> vector<8x32xf32>
    %138 = arith.addf %118, %137 : vector<8x32xf32>
    %139 = vector.extract_strided_slice %115 {offsets = [0, 16], sizes = [8, 16], strides = [1, 1]} : vector<8x96xf32> to vector<8x16xf32>
    %140 = vector.extract_strided_slice %115 {offsets = [0, 48], sizes = [8, 16], strides = [1, 1]} : vector<8x96xf32> to vector<8x16xf32>
    %141 = vector.extract_strided_slice %115 {offsets = [0, 80], sizes = [8, 16], strides = [1, 1]} : vector<8x96xf32> to vector<8x16xf32>
    %cst_86 = arith.constant dense<0.000000e+00> : vector<8x8xf32>
    %142 = tpu.matmul %141, %139, %cst_86 {dimension_numbers = #tpu.dot_dimension_numbers<[1], [1], [0], [0], [0, 0, 1, 0], [], []>} : vector<8x16xf32>, vector<8x16xf32>, vector<8x8xf32> -> vector<8x8xf32>
    %cst_87 = arith.constant 2.500000e-01 : f32
    %143 = vector.broadcast %cst_87 : f32 to vector<8x8xf32>
    %144 = arith.mulf %142, %143 : vector<8x8xf32>
    %cst_88 = arith.constant dense<0xFF800000> : vector<8xf32>
    %145 = vector.multi_reduction <maximumf>, %144, %cst_88 [1] : vector<8x8xf32> to vector<8xf32>
    %146 = vector.shape_cast %145 : vector<8xf32> to vector<8x1xf32>
    %147 = vector.broadcast %146 : vector<8x1xf32> to vector<8x8xf32>
    %148 = arith.subf %144, %147 : vector<8x8xf32>
    %149 = math.exp %148 : vector<8x8xf32>
    %cst_89 = arith.constant dense<0.000000e+00> : vector<8xf32>
    %150 = vector.multi_reduction <add>, %149, %cst_89 [1] : vector<8x8xf32> to vector<8xf32>
    %151 = vector.shape_cast %150 : vector<8xf32> to vector<8x1xf32>
    %152 = tpu.reciprocal %151 {approx = true} : vector<8x1xf32> -> vector<8x1xf32>
    %153 = vector.broadcast %152 : vector<8x1xf32> to vector<8x8xf32>
    %154 = arith.mulf %149, %153 : vector<8x8xf32>
    %cst_90 = arith.constant dense<0.000000e+00> : vector<8x16xf32>
    %155 = tpu.matmul %154, %140, %cst_90 {dimension_numbers = #tpu.dot_dimension_numbers<[1], [0], [0], [1], [0, 0, 1, 1], [], []>} : vector<8x8xf32>, vector<8x16xf32>, vector<8x16xf32> -> vector<8x16xf32>
    %156 = vector.extract_strided_slice %111 {offsets = [16, 0], sizes = [16, 32], strides = [1, 1]} : vector<32x32xf32> to vector<16x32xf32>
    %cst_91 = arith.constant dense<0.000000e+00> : vector<8x32xf32>
    %157 = tpu.matmul %155, %156, %cst_91 {dimension_numbers = #tpu.dot_dimension_numbers<[1], [0], [0], [1], [0, 0, 1, 1], [], []>} : vector<8x16xf32>, vector<16x32xf32>, vector<8x32xf32> -> vector<8x32xf32>
    %158 = arith.addf %138, %157 : vector<8x32xf32>
    %159 = arith.addf %158, %108 : vector<8x32xf32>
    %cst_92 = arith.constant dense<0.000000e+00> : vector<8xf32>
    %160 = vector.multi_reduction <add>, %159, %cst_92 [1] : vector<8x32xf32> to vector<8xf32>
    %161 = vector.shape_cast %160 : vector<8xf32> to vector<8x1xf32>
    %cst_93 = arith.constant 3.200000e+01 : f32
    %162 = vector.broadcast %cst_93 : f32 to vector<8x1xf32>
    %163 = arith.divf %161, %162 : vector<8x1xf32>
    %164 = vector.broadcast %163 : vector<8x1xf32> to vector<8x32xf32>
    %165 = arith.subf %159, %164 : vector<8x32xf32>
    %166 = arith.mulf %165, %165 : vector<8x32xf32>
    %cst_94 = arith.constant dense<0.000000e+00> : vector<8xf32>
    %167 = vector.multi_reduction <add>, %166, %cst_94 [1] : vector<8x32xf32> to vector<8xf32>
    %168 = vector.shape_cast %167 : vector<8xf32> to vector<8x1xf32>
    %cst_95 = arith.constant 3.200000e+01 : f32
    %169 = vector.broadcast %cst_95 : f32 to vector<8x1xf32>
    %170 = arith.divf %168, %169 : vector<8x1xf32>
    %171 = vector.broadcast %163 : vector<8x1xf32> to vector<8x32xf32>
    %172 = arith.subf %159, %171 : vector<8x32xf32>
    %cst_96 = arith.constant 9.99999974E-6 : f32
    %173 = vector.broadcast %cst_96 : f32 to vector<8x1xf32>
    %174 = arith.addf %170, %173 : vector<8x1xf32>
    %175 = math.rsqrt %174 : vector<8x1xf32>
    %176 = vector.broadcast %175 : vector<8x1xf32> to vector<8x32xf32>
    %177 = arith.mulf %172, %176 : vector<8x32xf32>
    %178 = vector.broadcast %113 : vector<1x32xf32> to vector<8x32xf32>
    %179 = arith.mulf %177, %178 : vector<8x32xf32>
    %180 = vector.broadcast %114 : vector<1x32xf32> to vector<8x32xf32>
    %181 = arith.addf %179, %180 : vector<8x32xf32>
    %c0_97 = arith.constant 0 : index
    %c0_98 = arith.constant 0 : index
    %182 = vector.load %arg26[%c0_97, %c0_98] : memref<32x128xf32, #tpu.memory_space<vmem>>, vector<32x128xf32>
    %c0_99 = arith.constant 0 : index
    %c0_100 = arith.constant 0 : index
    %183 = vector.load %arg27[%c0_99, %c0_100] : memref<1x128xf32, #tpu.memory_space<vmem>>, vector<1x128xf32>
    %cst_101 = arith.constant dense<0.000000e+00> : vector<8x128xf32>
    %184 = tpu.matmul %181, %182, %cst_101 {dimension_numbers = #tpu.dot_dimension_numbers<[1], [0], [0], [1], [0, 0, 1, 1], [], []>} : vector<8x32xf32>, vector<32x128xf32>, vector<8x128xf32> -> vector<8x128xf32>
    %185 = vector.broadcast %183 : vector<1x128xf32> to vector<8x128xf32>
    %186 = arith.addf %184, %185 : vector<8x128xf32>
    %cst_102 = arith.constant 2.000000e+01 : f32
    %187 = vector.broadcast %cst_102 : f32 to vector<8x128xf32>
    %188 = arith.cmpf ogt, %186, %187 : vector<8x128xf32>
    %cst_103 = arith.constant 2.000000e+01 : f32
    %189 = vector.broadcast %cst_103 : f32 to vector<8x128xf32>
    %190 = arith.minimumf %186, %189 : vector<8x128xf32>
    %191 = math.exp %190 : vector<8x128xf32>
    %192 = math.log1p %191 : vector<8x128xf32>
    %193 = arith.select %188, %186, %192 : vector<8x128xi1>, vector<8x128xf32>
    %194 = tpu.iota {dimensions = array<i32: 1>} : vector<8x128xi32>
    %c64_i32 = arith.constant 64 : i32
    %195 = vector.broadcast %c64_i32 : i32 to vector<8x128xi32>
    %196 = arith.cmpi sge, %194, %195 : vector<8x128xi32>
    %197 = arith.select %196, %193, %186 : vector<8x128xi1>, vector<8x128xf32>
    %c0_104 = arith.constant 0 : index
    %c0_105 = arith.constant 0 : index
    %c0_106 = arith.constant 0 : index
    %198 = vector.load %arg28[%c0_104, %c0_105, %c0_106] : memref<1x8x128xf32, #tpu.memory_space<vmem>>, vector<1x8x128xf32>
    %199 = vector.shape_cast %198 : vector<1x8x128xf32> to vector<8x128xf32>
    %200 = vector.shape_cast %197 : vector<8x128xf32> to vector<1x8x128xf32>
    tpu.vector_store %arg28[%c0_104, %c0_105, %c0_106], %200 {strides = array<i32>} : memref<1x8x128xf32, #tpu.memory_space<vmem>>, vector<1x8x128xf32>,
    return
  }
  func.func @transform_0(%arg0: i32) -> (i32, i32, i32) {
    %c0_i32 = arith.constant 0 : i32
    %c0_i32_0 = arith.constant 0 : i32
    %c0_i32_1 = arith.constant 0 : i32
    return %arg0, %c0_i32, %c0_i32_0 : i32, i32, i32
  }
  func.func @transform_1(%arg0: i32) -> (i32, i32, i32) {
    %c0_i32 = arith.constant 0 : i32
    %c0_i32_0 = arith.constant 0 : i32
    %c0_i32_1 = arith.constant 0 : i32
    return %arg0, %c0_i32, %c0_i32_0 : i32, i32, i32
  }
  func.func @transform_2(%arg0: i32) -> (i32, i32, i32) {
    %c0_i32 = arith.constant 0 : i32
    %c0_i32_0 = arith.constant 0 : i32
    %c0_i32_1 = arith.constant 0 : i32
    return %arg0, %c0_i32, %c0_i32_0 : i32, i32, i32
  }
  func.func @transform_3(%arg0: i32) -> (i32, i32) {
    %c0_i32 = arith.constant 0 : i32
    %c0_i32_0 = arith.constant 0 : i32
    %c0_i32_1 = arith.constant 0 : i32
    return %c0_i32, %c0_i32_0 : i32, i32
  }
  func.func @transform_4(%arg0: i32) -> (i32, i32) {
    %c0_i32 = arith.constant 0 : i32
    %c0_i32_0 = arith.constant 0 : i32
    %c0_i32_1 = arith.constant 0 : i32
    return %c0_i32, %c0_i32_0 : i32, i32
  }
  func.func @transform_5(%arg0: i32) -> (i32, i32) {
    %c0_i32 = arith.constant 0 : i32
    %c0_i32_0 = arith.constant 0 : i32
    %c0_i32_1 = arith.constant 0 : i32
    return %c0_i32, %c0_i32_0 : i32, i32
  }
  func.func @transform_6(%arg0: i32) -> (i32, i32) {
    %c0_i32 = arith.constant 0 : i32
    %c0_i32_0 = arith.constant 0 : i32
    %c0_i32_1 = arith.constant 0 : i32
    return %c0_i32, %c0_i32_0 : i32, i32
  }
  func.func @transform_7(%arg0: i32) -> (i32, i32) {
    %c0_i32 = arith.constant 0 : i32
    %c0_i32_0 = arith.constant 0 : i32
    %c0_i32_1 = arith.constant 0 : i32
    return %c0_i32, %c0_i32_0 : i32, i32
  }
  func.func @transform_8(%arg0: i32) -> (i32, i32) {
    %c0_i32 = arith.constant 0 : i32
    %c0_i32_0 = arith.constant 0 : i32
    %c0_i32_1 = arith.constant 0 : i32
    return %c0_i32, %c0_i32_0 : i32, i32
  }
  func.func @transform_9(%arg0: i32) -> (i32, i32) {
    %c0_i32 = arith.constant 0 : i32
    %c0_i32_0 = arith.constant 0 : i32
    %c0_i32_1 = arith.constant 0 : i32
    return %c0_i32, %c0_i32_0 : i32, i32
  }
  func.func @transform_10(%arg0: i32) -> (i32, i32) {
    %c0_i32 = arith.constant 0 : i32
    %c0_i32_0 = arith.constant 0 : i32
    %c0_i32_1 = arith.constant 0 : i32
    return %c0_i32, %c0_i32_0 : i32, i32
  }
  func.func @transform_11(%arg0: i32) -> (i32, i32) {
    %c0_i32 = arith.constant 0 : i32
    %c0_i32_0 = arith.constant 0 : i32
    %c0_i32_1 = arith.constant 0 : i32
    return %c0_i32, %c0_i32_0 : i32, i32
  }
  func.func @transform_12(%arg0: i32) -> (i32, i32) {
    %c0_i32 = arith.constant 0 : i32
    %c0_i32_0 = arith.constant 0 : i32
    %c0_i32_1 = arith.constant 0 : i32
    return %c0_i32, %c0_i32_0 : i32, i32
  }
  func.func @transform_13(%arg0: i32) -> (i32, i32) {
    %c0_i32 = arith.constant 0 : i32
    %c0_i32_0 = arith.constant 0 : i32
    %c0_i32_1 = arith.constant 0 : i32
    return %c0_i32, %c0_i32_0 : i32, i32
  }
  func.func @transform_14(%arg0: i32) -> (i32, i32) {
    %c0_i32 = arith.constant 0 : i32
    %c0_i32_0 = arith.constant 0 : i32
    %c0_i32_1 = arith.constant 0 : i32
    return %c0_i32, %c0_i32_0 : i32, i32
  }
  func.func @transform_15(%arg0: i32) -> (i32, i32) {
    %c0_i32 = arith.constant 0 : i32
    %c0_i32_0 = arith.constant 0 : i32
    %c0_i32_1 = arith.constant 0 : i32
    return %c0_i32, %c0_i32_0 : i32, i32
  }
  func.func @transform_16(%arg0: i32) -> (i32, i32) {
    %c0_i32 = arith.constant 0 : i32
    %c0_i32_0 = arith.constant 0 : i32
    %c0_i32_1 = arith.constant 0 : i32
    return %c0_i32, %c0_i32_0 : i32, i32
  }
  func.func @transform_17(%arg0: i32) -> (i32, i32) {
    %c0_i32 = arith.constant 0 : i32
    %c0_i32_0 = arith.constant 0 : i32
    %c0_i32_1 = arith.constant 0 : i32
    return %c0_i32, %c0_i32_0 : i32, i32
  }
  func.func @transform_18(%arg0: i32) -> (i32, i32) {
    %c0_i32 = arith.constant 0 : i32
    %c0_i32_0 = arith.constant 0 : i32
    %c0_i32_1 = arith.constant 0 : i32
    return %c0_i32, %c0_i32_0 : i32, i32
  }
  func.func @transform_19(%arg0: i32) -> (i32, i32) {
    %c0_i32 = arith.constant 0 : i32
    %c0_i32_0 = arith.constant 0 : i32
    %c0_i32_1 = arith.constant 0 : i32
    return %c0_i32, %c0_i32_0 : i32, i32
  }
  func.func @transform_20(%arg0: i32) -> (i32, i32) {
    %c0_i32 = arith.constant 0 : i32
    %c0_i32_0 = arith.constant 0 : i32
    %c0_i32_1 = arith.constant 0 : i32
    return %c0_i32, %c0_i32_0 : i32, i32
  }
  func.func @transform_21(%arg0: i32) -> (i32, i32) {
    %c0_i32 = arith.constant 0 : i32
    %c0_i32_0 = arith.constant 0 : i32
    %c0_i32_1 = arith.constant 0 : i32
    return %c0_i32, %c0_i32_0 : i32, i32
  }
  func.func @transform_22(%arg0: i32) -> (i32, i32) {
    %c0_i32 = arith.constant 0 : i32
    %c0_i32_0 = arith.constant 0 : i32
    %c0_i32_1 = arith.constant 0 : i32
    return %c0_i32, %c0_i32_0 : i32, i32
  }
  func.func @transform_23(%arg0: i32) -> (i32, i32) {
    %c0_i32 = arith.constant 0 : i32
    %c0_i32_0 = arith.constant 0 : i32
    %c0_i32_1 = arith.constant 0 : i32
    return %c0_i32, %c0_i32_0 : i32, i32
  }
  func.func @transform_24(%arg0: i32) -> (i32, i32) {
    %c0_i32 = arith.constant 0 : i32
    %c0_i32_0 = arith.constant 0 : i32
    %c0_i32_1 = arith.constant 0 : i32
    return %c0_i32, %c0_i32_0 : i32, i32
  }
  func.func @transform_25(%arg0: i32) -> (i32, i32) {
    %c0_i32 = arith.constant 0 : i32
    %c0_i32_0 = arith.constant 0 : i32
    %c0_i32_1 = arith.constant 0 : i32
    return %c0_i32, %c0_i32_0 : i32, i32
  }
  func.func @transform_26(%arg0: i32) -> (i32, i32) {
    %c0_i32 = arith.constant 0 : i32
    %c0_i32_0 = arith.constant 0 : i32
    %c0_i32_1 = arith.constant 0 : i32
    return %c0_i32, %c0_i32_0 : i32, i32
  }
  func.func @transform_27(%arg0: i32) -> (i32, i32, i32) {
    %c0_i32 = arith.constant 0 : i32
    %c0_i32_0 = arith.constant 0 : i32
    %c0_i32_1 = arith.constant 0 : i32
    return %arg0, %c0_i32, %c0_i32_0 : i32, i32, i32
  }
}

</mosaic_0001>

<llo_original>
// kernel: tpu_custom_call.1
$region0: #{tpu_custom_call.1}
  #allocation0 [shape = 'u32[]', space=smem, size = 0x4, offset = 0x4, fixed_abs, tag = 'smem constant byte address 0x4 - core index']
  #allocation1 [shape = 'u32[72,128]{1,0:T(1,128)}', space=vmem, size = 0x9000, scoped, tag = 'internal scratch']
  %s0 = inlined_call_operand.hbm [shape: f32[2,8,32], index: 0, kind: input, shape index: {}]
  %s1 = inlined_call_operand.hbm [shape: f32[2,8,32], index: 1, kind: input, shape index: {}]
  %s2 = inlined_call_operand.vmem [shape: f32[2,8,6], index: 2, kind: input, shape index: {}]
  %s3 = inlined_call_operand.hbm [shape: f32[6,32], index: 3, kind: input, shape index: {}]
  %s4 = inlined_call_operand.vmem [shape: f32[1,32], index: 4, kind: input, shape index: {}]
  %s5 = inlined_call_operand.vmem [shape: f32[32,96], index: 5, kind: input, shape index: {}]
  %s6 = inlined_call_operand.hbm [shape: f32[32,96], index: 6, kind: input, shape index: {}]
  %s7 = inlined_call_operand.hbm [shape: f32[32,96], index: 7, kind: input, shape index: {}]
  %s8 = inlined_call_operand.vmem [shape: f32[1,96], index: 8, kind: input, shape index: {}]
  %s9 = inlined_call_operand.vmem [shape: f32[96,96], index: 9, kind: input, shape index: {}]
  %s10 = inlined_call_operand.vmem [shape: f32[1,96], index: 10, kind: input, shape index: {}]
  %s11 = inlined_call_operand.vmem [shape: f32[96,32], index: 11, kind: input, shape index: {}]
  %s12 = inlined_call_operand.vmem [shape: f32[1,32], index: 12, kind: input, shape index: {}]
  %s13 = inlined_call_operand.hbm [shape: f32[32,96], index: 13, kind: input, shape index: {}]
  %s14 = inlined_call_operand.hbm [shape: f32[32,32], index: 14, kind: input, shape index: {}]
  %s15 = inlined_call_operand.hbm [shape: f32[32,32], index: 15, kind: input, shape index: {}]
  %s16 = inlined_call_operand.vmem [shape: f32[1,32], index: 16, kind: input, shape index: {}]
  %s17 = inlined_call_operand.vmem [shape: f32[1,32], index: 17, kind: input, shape index: {}]
  %s18 = inlined_call_operand.vmem [shape: f32[1,32], index: 18, kind: input, shape index: {}]
  %s19 = inlined_call_operand.hbm [shape: f32[32,96], index: 19, kind: input, shape index: {}]
  %s20 = inlined_call_operand.hbm [shape: f32[32,32], index: 20, kind: input, shape index: {}]
  %s21 = inlined_call_operand.hbm [shape: f32[32,32], index: 21, kind: input, shape index: {}]
  %s22 = inlined_call_operand.vmem [shape: f32[1,32], index: 22, kind: input, shape index: {}]
  %s23 = inlined_call_operand.vmem [shape: f32[1,32], index: 23, kind: input, shape index: {}]
  %s24 = inlined_call_operand.vmem [shape: f32[1,32], index: 24, kind: input, shape index: {}]
  %s25 = inlined_call_operand.hbm [shape: f32[32,128], index: 25, kind: input, shape index: {}]
  %s26 = inlined_call_operand.vmem [shape: f32[1,128], index: 26, kind: input, shape index: {}]
  %s27 = inlined_call_operand.hbm [shape: f32[2,8,128], index: 27, kind: output, shape index: {}]
  %s28 = sld [smem:[#allocation0]]
  $region189: #{tpu_custom_call.1} parent=0
    _
  %s30 = ssub.s32 1, %s28
  %s31 = scalar_select 0, %s30, %s28
  $region1: #{tpu_custom_call.1} parent=0
    #allocation2 [shape = 'u8[8192]{0}', space=vmem, size = 0x2000, scoped, tag = 'input window, operand 0']
    #allocation3 [shape = 's32[2]{0}', space=sflag, size = 0x8, scoped, tag = 'scoped memory for tpu_custom_call.1']
    #allocation4 [shape = 's32[2]{0}', space=sflag, size = 0x8, scoped, tag = 'scoped memory for tpu_custom_call.1']
    #allocation5 [shape = 'u8[8192]{0}', space=vmem, size = 0x2000, scoped, tag = 'input window, operand 1']
    #allocation6 [shape = 's32[2]{0}', space=sflag, size = 0x8, scoped, tag = 'scoped memory for tpu_custom_call.1']
    #allocation7 [shape = 'u8[4096]{0}', space=vmem, size = 0x1000, scoped, tag = 'input window, operand 3, single buffered']
    #allocation8 [shape = 'u8[16384]{0}', space=vmem, size = 0x4000, scoped, tag = 'input window, operand 6, single buffered']
    #allocation9 [shape = 's32[1]{0}', space=sflag, size = 0x4, scoped, tag = 'scoped memory for tpu_custom_call.1']
    #allocation10 [shape = 'u8[16384]{0}', space=vmem, size = 0x4000, scoped, tag = 'input window, operand 7, single buffered']
    #allocation11 [shape = 'u8[16384]{0}', space=vmem, size = 0x4000, scoped, tag = 'input window, operand 13, single buffered']
    #allocation12 [shape = 's32[1]{0}', space=sflag, size = 0x4, scoped, tag = 'scoped memory for tpu_custom_call.1']
    #allocation13 [shape = 'u8[16384]{0}', space=vmem, size = 0x4000, scoped, tag = 'input window, operand 14, single buffered']
    #allocation14 [shape = 'u8[16384]{0}', space=vmem, size = 0x4000, scoped, tag = 'input window, operand 15, single buffered']
    #allocation15 [shape = 's32[1]{0}', space=sflag, size = 0x4, scoped, tag = 'scoped memory for tpu_custom_call.1']
    #allocation16 [shape = 'u8[16384]{0}', space=vmem, size = 0x4000, scoped, tag = 'input window, operand 19, single buffered']
    #allocation17 [shape = 'u8[16384]{0}', space=vmem, size = 0x4000, scoped, tag = 'input window, operand 20, single buffered']
    #allocation18 [shape = 's32[1]{0}', space=sflag, size = 0x4, scoped, tag = 'scoped memory for tpu_custom_call.1']
    #allocation19 [shape = 'u8[16384]{0}', space=vmem, size = 0x4000, scoped, tag = 'input window, operand 21, single buffered']
    #allocation20 [shape = 'u8[16384]{0}', space=vmem, size = 0x4000, scoped, tag = 'input window, operand 25, single buffered']
    #allocation21 [shape = 's32[1]{0}', space=sflag, size = 0x4, scoped, tag = 'scoped memory for tpu_custom_call.1']
    #allocation22 [shape = 'u8[8192]{0}', space=vmem, size = 0x2000, scoped, tag = 'output window, operand 0']
    %32 = vsyncpa [#allocation3], 0
    %s33 = scalar_lea.sflag [#allocation3], 1
    %34 = vsyncpa %s33, 0
    %35 = vsyncpa [#allocation6], 0
    %s36 = scalar_lea.sflag [#allocation6], 1
    %37 = vsyncpa %s36, 0
    %38 = vsyncpa [#allocation9], 0
    %39 = vsyncpa [#allocation12], 0
    %40 = vsyncpa [#allocation15], 0
    %41 = vsyncpa [#allocation18], 0
    %42 = vsyncpa [#allocation21], 0
    %43 = vsyncpa [#allocation4], 0
    %s44 = scalar_lea.sflag [#allocation4], 1
    %45 = vsyncpa %s44, 0
    loop: start=0, step=1, limit=4
    $region2: #{tpu_custom_call.1} parent=1 // loop_pre_header
      _
    $region3: #{tpu_custom_call.1} parent=1 // loop_header
      %s47 = sphi 0, %s51
      %p48 = scmp.ge.s32.totalorder %s47, 4
      %s57 = sphi 0, %s59
      %s60 = sphi 0, %s57
      %s61 = sphi 0, %s60
      %s77 = sphi 0, %s61
      %s83 = sphi 0, %s85
      %s86 = sphi 0, %s83
      %s87 = sphi 0, %s86
      %s103 = sphi 0, %s87
      %s109 = sphi 0, %s111
      %s112 = sphi 0, %s109
      %s113 = sphi 0, %s112
      %s129 = sphi 0, %s113
      %s133 = sphi 0, %s133
      %s135 = sphi 0, %s133
      %s136 = sphi 0, %s135
      %s150 = sphi 0, %s136
      %s154 = sphi 0, %s154
      %s156 = sphi 0, %s154
      %s157 = sphi 0, %s156
      %s171 = sphi 0, %s157
      %s175 = sphi 0, %s175
      %s177 = sphi 0, %s175
      %s178 = sphi 0, %s177
      %s192 = sphi 0, %s178
      %s196 = sphi 0, %s196
      %s198 = sphi 0, %s196
      %s199 = sphi 0, %s198
      %s213 = sphi 0, %s199
      %s217 = sphi 0, %s217
      %s219 = sphi 0, %s217
      %s220 = sphi 0, %s219
      %s234 = sphi 0, %s220
      %s238 = sphi 0, %s238
      %s240 = sphi 0, %s238
      %s241 = sphi 0, %s240
      %s255 = sphi 0, %s241
      %s259 = sphi 0, %s259
      %s261 = sphi 0, %s259
      %s262 = sphi 0, %s261
      %s276 = sphi 0, %s262
      %s280 = sphi 0, %s280
      %s282 = sphi 0, %s280
      %s283 = sphi 0, %s282
      %s297 = sphi 0, %s283
      %s301 = sphi 0, %s301
      %s303 = sphi 0, %s301
      %s304 = sphi 0, %s303
      %s318 = sphi 0, %s304
      %s322 = sphi 0, %s322
      %s324 = sphi 0, %s322
      %s325 = sphi 0, %s324
      %s339 = sphi 0, %s325
      %s343 = sphi 0, %s343
      %s345 = sphi 0, %s343
      %s346 = sphi 0, %s345
      %s360 = sphi 0, %s346
      %s364 = sphi 0, %s364
      %s366 = sphi 0, %s364
      %s367 = sphi 0, %s366
      %s381 = sphi 0, %s367
      %s385 = sphi 0, %s385
      %s387 = sphi 0, %s385
      %s388 = sphi 0, %s387
      %s402 = sphi 0, %s388
      %s406 = sphi 0, %s406
      %s408 = sphi 0, %s406
      %s409 = sphi 0, %s408
      %s423 = sphi 0, %s409
      %s427 = sphi 0, %s427
      %s429 = sphi 0, %s427
      %s430 = sphi 0, %s429
      %s444 = sphi 0, %s430
      %s448 = sphi 0, %s448
      %s450 = sphi 0, %s448
      %s451 = sphi 0, %s450
      %s465 = sphi 0, %s451
      %s469 = sphi 0, %s469
      %s471 = sphi 0, %s469
      %s472 = sphi 0, %s471
      %s486 = sphi 0, %s472
      %s490 = sphi 0, %s490
      %s492 = sphi 0, %s490
      %s493 = sphi 0, %s492
      %s507 = sphi 0, %s493
      %s511 = sphi 0, %s511
      %s513 = sphi 0, %s511
      %s514 = sphi 0, %s513
      %s528 = sphi 0, %s514
      %s532 = sphi 0, %s532
      %s534 = sphi 0, %s532
      %s535 = sphi 0, %s534
      %s549 = sphi 0, %s535
      %s553 = sphi 0, %s553
      %s555 = sphi 0, %s553
      %s556 = sphi 0, %s555
      %s570 = sphi 0, %s556
      %s574 = sphi 0, %s574
      %s576 = sphi 0, %s574
      %s577 = sphi 0, %s576
      %s591 = sphi 0, %s577
      %s595 = sphi 0, %s595
      %s597 = sphi 0, %s595
      %s598 = sphi 0, %s597
      %s612 = sphi 0, %s598
      %s616 = sphi 0, %s616
      %s618 = sphi 0, %s616
      %s619 = sphi 0, %s618
      %s633 = sphi 0, %s619
      %s639 = sphi 0, %s641
      %s642 = sphi 0, %s639
      %s643 = sphi 0, %s642
      %s659 = sphi 0, %s643
    $region4: #{tpu_custom_call.1} parent=1 // loop_header_branch
      %50 = sbr.rel (%p48) target = $region8
    $region5: #{tpu_custom_call.1} parent=1 // loop_body
      %s52 = ssub.s32 %s47, 1
      %s53 = ssub.s32 %s47, 2
      %s54 = sadd.s32 %s47, 1
      %s55 = ssub.s32 %s47, %s54
      %p56 = scmp.eq.s32.totalorder %s55, 0
      %s58 = sadd.s32 %s57, 1
      %s59 = scalar_select %p56, %s57, %s58
      %p62 = pneg %p56
      %p63 = scmp.eq.s32.totalorder %s47, 1
      %p64 = por %p62, %p63
      %p65 = scmp.ne.s32.totalorder %s57, %s60
      %p66 = scmp.eq.s32.totalorder %s47, 0
      %p67 = por %p65, %p66
      %p68 = scmp.ne.s32.totalorder %s57, %s60
      %p69 = scmp.eq.s32.totalorder %s52, 1
      %p70 = por %p68, %p69
      %p71 = scmp.ne.s32.totalorder %s60, %s61
      %p72 = scmp.eq.s32.totalorder %s52, 0
      %p73 = por %p71, %p72
      %p74 = scmp.ne.s32.totalorder %s60, %s61
      %p75 = scmp.eq.s32.totalorder %s53, 1
      %p76 = por %p74, %p75
      %p78 = scmp.ne.s32.totalorder %s61, %s77
      %p79 = scmp.eq.s32.totalorder %s53, 0
      %p80 = por %p78, %p79
      %s81 = ssub.s32 %s47, %s54
      %p82 = scmp.eq.s32.totalorder %s81, 0
      %s84 = sadd.s32 %s83, 1
      %s85 = scalar_select %p82, %s83, %s84
      %p88 = pneg %p82
      %p89 = scmp.eq.s32.totalorder %s47, 1
      %p90 = por %p88, %p89
      %p91 = scmp.ne.s32.totalorder %s83, %s86
      %p92 = scmp.eq.s32.totalorder %s47, 0
      %p93 = por %p91, %p92
      %p94 = scmp.ne.s32.totalorder %s83, %s86
      %p95 = scmp.eq.s32.totalorder %s52, 1
      %p96 = por %p94, %p95
      %p97 = scmp.ne.s32.totalorder %s86, %s87
      %p98 = scmp.eq.s32.totalorder %s52, 0
      %p99 = por %p97, %p98
      %p100 = scmp.ne.s32.totalorder %s86, %s87
      %p101 = scmp.eq.s32.totalorder %s53, 1
      %p102 = por %p100, %p101
      %p104 = scmp.ne.s32.totalorder %s87, %s103
      %p105 = scmp.eq.s32.totalorder %s53, 0
      %p106 = por %p104, %p105
      %s107 = ssub.s32 %s47, %s54
      %p108 = scmp.eq.s32.totalorder %s107, 0
      %s110 = sadd.s32 %s109, 1
      %s111 = scalar_select %p108, %s109, %s110
      %p114 = pneg %p108
      %p115 = scmp.eq.s32.totalorder %s47, 1
      %p116 = por %p114, %p115
      %p117 = scmp.ne.s32.totalorder %s109, %s112
      %p118 = scmp.eq.s32.totalorder %s47, 0
      %p119 = por %p117, %p118
      %p120 = scmp.ne.s32.totalorder %s109, %s112
      %p121 = scmp.eq.s32.totalorder %s52, 1
      %p122 = por %p120, %p121
      %p123 = scmp.ne.s32.totalorder %s112, %s113
      %p124 = scmp.eq.s32.totalorder %s52, 0
      %p125 = por %p123, %p124
      %p126 = scmp.ne.s32.totalorder %s112, %s113
      %p127 = scmp.eq.s32.totalorder %s53, 1
      %p128 = por %p126, %p127
      %p130 = scmp.ne.s32.totalorder %s113, %s129
      %p131 = scmp.eq.s32.totalorder %s53, 0
      %p132 = por %p130, %p131
      %s134 = sadd.s32 %s133, 1
      %p137 = scmp.eq.s32.totalorder %s47, 1
      %p138 = scmp.ne.s32.totalorder %s133, %s135
      %p139 = scmp.eq.s32.totalorder %s47, 0
      %p140 = por %p138, %p139
      %p141 = scmp.ne.s32.totalorder %s133, %s135
      %p142 = scmp.eq.s32.totalorder %s52, 1
      %p143 = por %p141, %p142
      %p144 = scmp.ne.s32.totalorder %s135, %s136
      %p145 = scmp.eq.s32.totalorder %s52, 0
      %p146 = por %p144, %p145
      %p147 = scmp.ne.s32.totalorder %s135, %s136
      %p148 = scmp.eq.s32.totalorder %s53, 1
      %p149 = por %p147, %p148
      %p151 = scmp.ne.s32.totalorder %s136, %s150
      %p152 = scmp.eq.s32.totalorder %s53, 0
      %p153 = por %p151, %p152
      %s155 = sadd.s32 %s154, 1
      %p158 = scmp.eq.s32.totalorder %s47, 1
      %p159 = scmp.ne.s32.totalorder %s154, %s156
      %p160 = scmp.eq.s32.totalorder %s47, 0
      %p161 = por %p159, %p160
      %p162 = scmp.ne.s32.totalorder %s154, %s156
      %p163 = scmp.eq.s32.totalorder %s52, 1
      %p164 = por %p162, %p163
      %p165 = scmp.ne.s32.totalorder %s156, %s157
      %p166 = scmp.eq.s32.totalorder %s52, 0
      %p167 = por %p165, %p166
      %p168 = scmp.ne.s32.totalorder %s156, %s157
      %p169 = scmp.eq.s32.totalorder %s53, 1
      %p170 = por %p168, %p169
      %p172 = scmp.ne.s32.totalorder %s157, %s171
      %p173 = scmp.eq.s32.totalorder %s53, 0
      %p174 = por %p172, %p173
      %s176 = sadd.s32 %s175, 1
      %p179 = scmp.eq.s32.totalorder %s47, 1
      %p180 = scmp.ne.s32.totalorder %s175, %s177
      %p181 = scmp.eq.s32.totalorder %s47, 0
      %p182 = por %p180, %p181
      %p183 = scmp.ne.s32.totalorder %s175, %s177
      %p184 = scmp.eq.s32.totalorder %s52, 1
      %p185 = por %p183, %p184
      %p186 = scmp.ne.s32.totalorder %s177, %s178
      %p187 = scmp.eq.s32.totalorder %s52, 0
      %p188 = por %p186, %p187
      %p189 = scmp.ne.s32.totalorder %s177, %s178
      %p190 = scmp.eq.s32.totalorder %s53, 1
      %p191 = por %p189, %p190
      %p193 = scmp.ne.s32.totalorder %s178, %s192
      %p194 = scmp.eq.s32.totalorder %s53, 0
      %p195 = por %p193, %p194
      %s197 = sadd.s32 %s196, 1
      %p200 = scmp.eq.s32.totalorder %s47, 1
      %p201 = scmp.ne.s32.totalorder %s196, %s198
      %p202 = scmp.eq.s32.totalorder %s47, 0
      %p203 = por %p201, %p202
      %p204 = scmp.ne.s32.totalorder %s196, %s198
      %p205 = scmp.eq.s32.totalorder %s52, 1
      %p206 = por %p204, %p205
      %p207 = scmp.ne.s32.totalorder %s198, %s199
      %p208 = scmp.eq.s32.totalorder %s52, 0
      %p209 = por %p207, %p208
      %p210 = scmp.ne.s32.totalorder %s198, %s199
      %p211 = scmp.eq.s32.totalorder %s53, 1
      %p212 = por %p210, %p211
      %p214 = scmp.ne.s32.totalorder %s199, %s213
      %p215 = scmp.eq.s32.totalorder %s53, 0
      %p216 = por %p214, %p215
      %s218 = sadd.s32 %s217, 1
      %p221 = scmp.eq.s32.totalorder %s47, 1
      %p222 = scmp.ne.s32.totalorder %s217, %s219
      %p223 = scmp.eq.s32.totalorder %s47, 0
      %p224 = por %p222, %p223
      %p225 = scmp.ne.s32.totalorder %s217, %s219
      %p226 = scmp.eq.s32.totalorder %s52, 1
      %p227 = por %p225, %p226
      %p228 = scmp.ne.s32.totalorder %s219, %s220
      %p229 = scmp.eq.s32.totalorder %s52, 0
      %p230 = por %p228, %p229
      %p231 = scmp.ne.s32.totalorder %s219, %s220
      %p232 = scmp.eq.s32.totalorder %s53, 1
      %p233 = por %p231, %p232
      %p235 = scmp.ne.s32.totalorder %s220, %s234
      %p236 = scmp.eq.s32.totalorder %s53, 0
      %p237 = por %p235, %p236
      %s239 = sadd.s32 %s238, 1
      %p242 = scmp.eq.s32.totalorder %s47, 1
      %p243 = scmp.ne.s32.totalorder %s238, %s240
      %p244 = scmp.eq.s32.totalorder %s47, 0
      %p245 = por %p243, %p244
      %p246 = scmp.ne.s32.totalorder %s238, %s240
      %p247 = scmp.eq.s32.totalorder %s52, 1
      %p248 = por %p246, %p247
      %p249 = scmp.ne.s32.totalorder %s240, %s241
      %p250 = scmp.eq.s32.totalorder %s52, 0
      %p251 = por %p249, %p250
      %p252 = scmp.ne.s32.totalorder %s240, %s241
      %p253 = scmp.eq.s32.totalorder %s53, 1
      %p254 = por %p252, %p253
      %p256 = scmp.ne.s32.totalorder %s241, %s255
      %p257 = scmp.eq.s32.totalorder %s53, 0
      %p258 = por %p256, %p257
      %s260 = sadd.s32 %s259, 1
      %p263 = scmp.eq.s32.totalorder %s47, 1
      %p264 = scmp.ne.s32.totalorder %s259, %s261
      %p265 = scmp.eq.s32.totalorder %s47, 0
      %p266 = por %p264, %p265
      %p267 = scmp.ne.s32.totalorder %s259, %s261
      %p268 = scmp.eq.s32.totalorder %s52, 1
      %p269 = por %p267, %p268
      %p270 = scmp.ne.s32.totalorder %s261, %s262
      %p271 = scmp.eq.s32.totalorder %s52, 0
      %p272 = por %p270, %p271
      %p273 = scmp.ne.s32.totalorder %s261, %s262
      %p274 = scmp.eq.s32.totalorder %s53, 1
      %p275 = por %p273, %p274
      %p277 = scmp.ne.s32.totalorder %s262, %s276
      %p278 = scmp.eq.s32.totalorder %s53, 0
      %p279 = por %p277, %p278
      %s281 = sadd.s32 %s280, 1
      %p284 = scmp.eq.s32.totalorder %s47, 1
      %p285 = scmp.ne.s32.totalorder %s280, %s282
      %p286 = scmp.eq.s32.totalorder %s47, 0
      %p287 = por %p285, %p286
      %p288 = scmp.ne.s32.totalorder %s280, %s282
      %p289 = scmp.eq.s32.totalorder %s52, 1
      %p290 = por %p288, %p289
      %p291 = scmp.ne.s32.totalorder %s282, %s283
      %p292 = scmp.eq.s32.totalorder %s52, 0
      %p293 = por %p291, %p292
      %p294 = scmp.ne.s32.totalorder %s282, %s283
      %p295 = scmp.eq.s32.totalorder %s53, 1
      %p296 = por %p294, %p295
      %p298 = scmp.ne.s32.totalorder %s283, %s297
      %p299 = scmp.eq.s32.totalorder %s53, 0
      %p300 = por %p298, %p299
      %s302 = sadd.s32 %s301, 1
      %p305 = scmp.eq.s32.totalorder %s47, 1
      %p306 = scmp.ne.s32.totalorder %s301, %s303
      %p307 = scmp.eq.s32.totalorder %s47, 0
      %p308 = por %p306, %p307
      %p309 = scmp.ne.s32.totalorder %s301, %s303
      %p310 = scmp.eq.s32.totalorder %s52, 1
      %p311 = por %p309, %p310
      %p312 = scmp.ne.s32.totalorder %s303, %s304
      %p313 = scmp.eq.s32.totalorder %s52, 0
      %p314 = por %p312, %p313
      %p315 = scmp.ne.s32.totalorder %s303, %s304
      %p316 = scmp.eq.s32.totalorder %s53, 1
      %p317 = por %p315, %p316
      %p319 = scmp.ne.s32.totalorder %s304, %s318
      %p320 = scmp.eq.s32.totalorder %s53, 0
      %p321 = por %p319, %p320
      %s323 = sadd.s32 %s322, 1
      %p326 = scmp.eq.s32.totalorder %s47, 1
      %p327 = scmp.ne.s32.totalorder %s322, %s324
      %p328 = scmp.eq.s32.totalorder %s47, 0
      %p329 = por %p327, %p328
      %p330 = scmp.ne.s32.totalorder %s322, %s324
      %p331 = scmp.eq.s32.totalorder %s52, 1
      %p332 = por %p330, %p331
      %p333 = scmp.ne.s32.totalorder %s324, %s325
      %p334 = scmp.eq.s32.totalorder %s52, 0
      %p335 = por %p333, %p334
      %p336 = scmp.ne.s32.totalorder %s324, %s325
      %p337 = scmp.eq.s32.totalorder %s53, 1
      %p338 = por %p336, %p337
      %p340 = scmp.ne.s32.totalorder %s325, %s339
      %p341 = scmp.eq.s32.totalorder %s53, 0
      %p342 = por %p340, %p341
      %s344 = sadd.s32 %s343, 1
      %p347 = scmp.eq.s32.totalorder %s47, 1
      %p348 = scmp.ne.s32.totalorder %s343, %s345
      %p349 = scmp.eq.s32.totalorder %s47, 0
      %p350 = por %p348, %p349
      %p351 = scmp.ne.s32.totalorder %s343, %s345
      %p352 = scmp.eq.s32.totalorder %s52, 1
      %p353 = por %p351, %p352
      %p354 = scmp.ne.s32.totalorder %s345, %s346
      %p355 = scmp.eq.s32.totalorder %s52, 0
      %p356 = por %p354, %p355
      %p357 = scmp.ne.s32.totalorder %s345, %s346
      %p358 = scmp.eq.s32.totalorder %s53, 1
      %p359 = por %p357, %p358
      %p361 = scmp.ne.s32.totalorder %s346, %s360
      %p362 = scmp.eq.s32.totalorder %s53, 0
      %p363 = por %p361, %p362
      %s365 = sadd.s32 %s364, 1
      %p368 = scmp.eq.s32.totalorder %s47, 1
      %p369 = scmp.ne.s32.totalorder %s364, %s366
      %p370 = scmp.eq.s32.totalorder %s47, 0
      %p371 = por %p369, %p370
      %p372 = scmp.ne.s32.totalorder %s364, %s366
      %p373 = scmp.eq.s32.totalorder %s52, 1
      %p374 = por %p372, %p373
      %p375 = scmp.ne.s32.totalorder %s366, %s367
      %p376 = scmp.eq.s32.totalorder %s52, 0
      %p377 = por %p375, %p376
      %p378 = scmp.ne.s32.totalorder %s366, %s367
      %p379 = scmp.eq.s32.totalorder %s53, 1
      %p380 = por %p378, %p379
      %p382 = scmp.ne.s32.totalorder %s367, %s381
      %p383 = scmp.eq.s32.totalorder %s53, 0
      %p384 = por %p382, %p383
      %s386 = sadd.s32 %s385, 1
      %p389 = scmp.eq.s32.totalorder %s47, 1
      %p390 = scmp.ne.s32.totalorder %s385, %s387
      %p391 = scmp.eq.s32.totalorder %s47, 0
      %p392 = por %p390, %p391
      %p393 = scmp.ne.s32.totalorder %s385, %s387
      %p394 = scmp.eq.s32.totalorder %s52, 1
      %p395 = por %p393, %p394
      %p396 = scmp.ne.s32.totalorder %s387, %s388
      %p397 = scmp.eq.s32.totalorder %s52, 0
      %p398 = por %p396, %p397
      %p399 = scmp.ne.s32.totalorder %s387, %s388
      %p400 = scmp.eq.s32.totalorder %s53, 1
      %p401 = por %p399, %p400
      %p403 = scmp.ne.s32.totalorder %s388, %s402
      %p404 = scmp.eq.s32.totalorder %s53, 0
      %p405 = por %p403, %p404
      %s407 = sadd.s32 %s406, 1
      %p410 = scmp.eq.s32.totalorder %s47, 1
      %p411 = scmp.ne.s32.totalorder %s406, %s408
      %p412 = scmp.eq.s32.totalorder %s47, 0
      %p413 = por %p411, %p412
      %p414 = scmp.ne.s32.totalorder %s406, %s408
      %p415 = scmp.eq.s32.totalorder %s52, 1
      %p416 = por %p414, %p415
      %p417 = scmp.ne.s32.totalorder %s408, %s409
      %p418 = scmp.eq.s32.totalorder %s52, 0
      %p419 = por %p417, %p418
      %p420 = scmp.ne.s32.totalorder %s408, %s409
      %p421 = scmp.eq.s32.totalorder %s53, 1
      %p422 = por %p420, %p421
      %p424 = scmp.ne.s32.totalorder %s409, %s423
      %p425 = scmp.eq.s32.totalorder %s53, 0
      %p426 = por %p424, %p425
      %s428 = sadd.s32 %s427, 1
      %p431 = scmp.eq.s32.totalorder %s47, 1
      %p432 = scmp.ne.s32.totalorder %s427, %s429
      %p433 = scmp.eq.s32.totalorder %s47, 0
      %p434 = por %p432, %p433
      %p435 = scmp.ne.s32.totalorder %s427, %s429
      %p436 = scmp.eq.s32.totalorder %s52, 1
      %p437 = por %p435, %p436
      %p438 = scmp.ne.s32.totalorder %s429, %s430
      %p439 = scmp.eq.s32.totalorder %s52, 0
      %p440 = por %p438, %p439
      %p441 = scmp.ne.s32.totalorder %s429, %s430
      %p442 = scmp.eq.s32.totalorder %s53, 1
      %p443 = por %p441, %p442
      %p445 = scmp.ne.s32.totalorder %s430, %s444
      %p446 = scmp.eq.s32.totalorder %s53, 0
      %p447 = por %p445, %p446
      %s449 = sadd.s32 %s448, 1
      %p452 = scmp.eq.s32.totalorder %s47, 1
      %p453 = scmp.ne.s32.totalorder %s448, %s450
      %p454 = scmp.eq.s32.totalorder %s47, 0
      %p455 = por %p453, %p454
      %p456 = scmp.ne.s32.totalorder %s448, %s450
      %p457 = scmp.eq.s32.totalorder %s52, 1
      %p458 = por %p456, %p457
      %p459 = scmp.ne.s32.totalorder %s450, %s451
      %p460 = scmp.eq.s32.totalorder %s52, 0
      %p461 = por %p459, %p460
      %p462 = scmp.ne.s32.totalorder %s450, %s451
      %p463 = scmp.eq.s32.totalorder %s53, 1
      %p464 = por %p462, %p463
      %p466 = scmp.ne.s32.totalorder %s451, %s465
      %p467 = scmp.eq.s32.totalorder %s53, 0
      %p468 = por %p466, %p467
      %s470 = sadd.s32 %s469, 1
      %p473 = scmp.eq.s32.totalorder %s47, 1
      %p474 = scmp.ne.s32.totalorder %s469, %s471
      %p475 = scmp.eq.s32.totalorder %s47, 0
      %p476 = por %p474, %p475
      %p477 = scmp.ne.s32.totalorder %s469, %s471
      %p478 = scmp.eq.s32.totalorder %s52, 1
      %p479 = por %p477, %p478
      %p480 = scmp.ne.s32.totalorder %s471, %s472
      %p481 = scmp.eq.s32.totalorder %s52, 0
      %p482 = por %p480, %p481
      %p483 = scmp.ne.s32.totalorder %s471, %s472
      %p484 = scmp.eq.s32.totalorder %s53, 1
      %p485 = por %p483, %p484
      %p487 = scmp.ne.s32.totalorder %s472, %s486
      %p488 = scmp.eq.s32.totalorder %s53, 0
      %p489 = por %p487, %p488
      %s491 = sadd.s32 %s490, 1
      %p494 = scmp.eq.s32.totalorder %s47, 1
      %p495 = scmp.ne.s32.totalorder %s490, %s492
      %p496 = scmp.eq.s32.totalorder %s47, 0
      %p497 = por %p495, %p496
      %p498 = scmp.ne.s32.totalorder %s490, %s492
      %p499 = scmp.eq.s32.totalorder %s52, 1
      %p500 = por %p498, %p499
      %p501 = scmp.ne.s32.totalorder %s492, %s493
      %p502 = scmp.eq.s32.totalorder %s52, 0
      %p503 = por %p501, %p502
      %p504 = scmp.ne.s32.totalorder %s492, %s493
      %p505 = scmp.eq.s32.totalorder %s53, 1
      %p506 = por %p504, %p505
      %p508 = scmp.ne.s32.totalorder %s493, %s507
      %p509 = scmp.eq.s32.totalorder %s53, 0
      %p510 = por %p508, %p509
      %s512 = sadd.s32 %s511, 1
      %p515 = scmp.eq.s32.totalorder %s47, 1
      %p516 = scmp.ne.s32.totalorder %s511, %s513
      %p517 = scmp.eq.s32.totalorder %s47, 0
      %p518 = por %p516, %p517
      %p519 = scmp.ne.s32.totalorder %s511, %s513
      %p520 = scmp.eq.s32.totalorder %s52, 1
      %p521 = por %p519, %p520
      %p522 = scmp.ne.s32.totalorder %s513, %s514
      %p523 = scmp.eq.s32.totalorder %s52, 0
      %p524 = por %p522, %p523
      %p525 = scmp.ne.s32.totalorder %s513, %s514
      %p526 = scmp.eq.s32.totalorder %s53, 1
      %p527 = por %p525, %p526
      %p529 = scmp.ne.s32.totalorder %s514, %s528
      %p530 = scmp.eq.s32.totalorder %s53, 0
      %p531 = por %p529, %p530
      %s533 = sadd.s32 %s532, 1
      %p536 = scmp.eq.s32.totalorder %s47, 1
      %p537 = scmp.ne.s32.totalorder %s532, %s534
      %p538 = scmp.eq.s32.totalorder %s47, 0
      %p539 = por %p537, %p538
      %p540 = scmp.ne.s32.totalorder %s532, %s534
      %p541 = scmp.eq.s32.totalorder %s52, 1
      %p542 = por %p540, %p541
      %p543 = scmp.ne.s32.totalorder %s534, %s535
      %p544 = scmp.eq.s32.totalorder %s52, 0
      %p545 = por %p543, %p544
      %p546 = scmp.ne.s32.totalorder %s534, %s535
      %p547 = scmp.eq.s32.totalorder %s53, 1
      %p548 = por %p546, %p547
      %p550 = scmp.ne.s32.totalorder %s535, %s549
      %p551 = scmp.eq.s32.totalorder %s53, 0
      %p552 = por %p550, %p551
      %s554 = sadd.s32 %s553, 1
      %p557 = scmp.eq.s32.totalorder %s47, 1
      %p558 = scmp.ne.s32.totalorder %s553, %s555
      %p559 = scmp.eq.s32.totalorder %s47, 0
      %p560 = por %p558, %p559
      %p561 = scmp.ne.s32.totalorder %s553, %s555
      %p562 = scmp.eq.s32.totalorder %s52, 1
      %p563 = por %p561, %p562
      %p564 = scmp.ne.s32.totalorder %s555, %s556
      %p565 = scmp.eq.s32.totalorder %s52, 0
      %p566 = por %p564, %p565
      %p567 = scmp.ne.s32.totalorder %s555, %s556
      %p568 = scmp.eq.s32.totalorder %s53, 1
      %p569 = por %p567, %p568
      %p571 = scmp.ne.s32.totalorder %s556, %s570
      %p572 = scmp.eq.s32.totalorder %s53, 0
      %p573 = por %p571, %p572
      %s575 = sadd.s32 %s574, 1
      %p578 = scmp.eq.s32.totalorder %s47, 1
      %p579 = scmp.ne.s32.totalorder %s574, %s576
      %p580 = scmp.eq.s32.totalorder %s47, 0
      %p581 = por %p579, %p580
      %p582 = scmp.ne.s32.totalorder %s574, %s576
      %p583 = scmp.eq.s32.totalorder %s52, 1
      %p584 = por %p582, %p583
      %p585 = scmp.ne.s32.totalorder %s576, %s577
      %p586 = scmp.eq.s32.totalorder %s52, 0
      %p587 = por %p585, %p586
      %p588 = scmp.ne.s32.totalorder %s576, %s577
      %p589 = scmp.eq.s32.totalorder %s53, 1
      %p590 = por %p588, %p589
      %p592 = scmp.ne.s32.totalorder %s577, %s591
      %p593 = scmp.eq.s32.totalorder %s53, 0
      %p594 = por %p592, %p593
      %s596 = sadd.s32 %s595, 1
      %p599 = scmp.eq.s32.totalorder %s47, 1
      %p600 = scmp.ne.s32.totalorder %s595, %s597
      %p601 = scmp.eq.s32.totalorder %s47, 0
      %p602 = por %p600, %p601
      %p603 = scmp.ne.s32.totalorder %s595, %s597
      %p604 = scmp.eq.s32.totalorder %s52, 1
      %p605 = por %p603, %p604
      %p606 = scmp.ne.s32.totalorder %s597, %s598
      %p607 = scmp.eq.s32.totalorder %s52, 0
      %p608 = por %p606, %p607
      %p609 = scmp.ne.s32.totalorder %s597, %s598
      %p610 = scmp.eq.s32.totalorder %s53, 1
      %p611 = por %p609, %p610
      %p613 = scmp.ne.s32.totalorder %s598, %s612
      %p614 = scmp.eq.s32.totalorder %s53, 0
      %p615 = por %p613, %p614
      %s617 = sadd.s32 %s616, 1
      %p620 = scmp.eq.s32.totalorder %s47, 1
      %p621 = scmp.ne.s32.totalorder %s616, %s618
      %p622 = scmp.eq.s32.totalorder %s47, 0
      %p623 = por %p621, %p622
      %p624 = scmp.ne.s32.totalorder %s616, %s618
      %p625 = scmp.eq.s32.totalorder %s52, 1
      %p626 = por %p624, %p625
      %p627 = scmp.ne.s32.totalorder %s618, %s619
      %p628 = scmp.eq.s32.totalorder %s52, 0
      %p629 = por %p627, %p628
      %p630 = scmp.ne.s32.totalorder %s618, %s619
      %p631 = scmp.eq.s32.totalorder %s53, 1
      %p632 = por %p630, %p631
      %p634 = scmp.ne.s32.totalorder %s619, %s633
      %p635 = scmp.eq.s32.totalorder %s53, 0
      %p636 = por %p634, %p635
      %s637 = ssub.s32 %s47, %s54
      %p638 = scmp.eq.s32.totalorder %s637, 0
      %s640 = sadd.s32 %s639, 1
      %s641 = scalar_select %p638, %s639, %s640
      %p644 = pneg %p638
      %p645 = scmp.eq.s32.totalorder %s47, 1
      %p646 = por %p644, %p645
      %p647 = scmp.ne.s32.totalorder %s639, %s642
      %p648 = scmp.eq.s32.totalorder %s47, 0
      %p649 = por %p647, %p648
      %p650 = scmp.ne.s32.totalorder %s639, %s642
      %p651 = scmp.eq.s32.totalorder %s52, 1
      %p652 = por %p650, %p651
      %p653 = scmp.ne.s32.totalorder %s642, %s643
      %p654 = scmp.eq.s32.totalorder %s52, 0
      %p655 = por %p653, %p654
      %p656 = scmp.ne.s32.totalorder %s642, %s643
      %p657 = scmp.eq.s32.totalorder %s53, 1
      %p658 = por %p656, %p657
      %p660 = scmp.ne.s32.totalorder %s643, %s659
      %p661 = scmp.eq.s32.totalorder %s53, 0
      %p662 = por %p660, %p661
      %p663 = scmp.le.s32.totalorder 1, %s47
      %p664 = scmp.lt.s32.totalorder %s47, 3
      %p665 = pnand %p663, %p664
      %p666 = pneg %p665
      // Predicated region
      $region9: #{tpu_custom_call.1} parent=5 // pred_check
        _
      $region10: #{tpu_custom_call.1} parent=5 // pred_check_branch
        %668 = sbr.rel (%p665) target = $region12
      $region11: #{tpu_custom_call.1} parent=5 // pred_region
        %s669 = ssub.s32 %s47, 1
        // Predicated region
        $region13: #{tpu_custom_call.1} parent=11 // pred_check
          %p670 = pneg %p146
        $region14: #{tpu_custom_call.1} parent=11 // pred_check_branch
          %672 = sbr.rel (%p670) target = $region16
        $region15: #{tpu_custom_call.1} parent=11 // pred_region
          %674 = vsyncadd [#allocation6], 0
          %s676 = sshll.u32 %s3, 4
          %s677 = int_to_ptr.hbm [resolvable:$true] %s676
          %s678 = sshll.u32 [#allocation7], 4
          %s679 = int_to_ptr.vmem [resolvable:$true] %s678
          %681 = dma.hbm_to_vmem [thread:$0]  %s677, 128, %s679, [#allocation6]
        $region16: #{tpu_custom_call.1} parent=11 // pred_fallthru
          _
        // Predicated region
        $region17: #{tpu_custom_call.1} parent=11 // pred_check
          %p682 = pneg %p167
        $region18: #{tpu_custom_call.1} parent=11 // pred_check_branch
          %684 = sbr.rel (%p682) target = $region20
        $region19: #{tpu_custom_call.1} parent=11 // pred_region
          _
        $region20: #{tpu_custom_call.1} parent=11 // pred_fallthru
          _
        // Predicated region
        $region21: #{tpu_custom_call.1} parent=11 // pred_check
          %p685 = pneg %p188
        $region22: #{tpu_custom_call.1} parent=11 // pred_check_branch
          %687 = sbr.rel (%p685) target = $region24
        $region23: #{tpu_custom_call.1} parent=11 // pred_region
          _
        $region24: #{tpu_custom_call.1} parent=11 // pred_fallthru
          _
        // Predicated region
        $region25: #{tpu_custom_call.1} parent=11 // pred_check
          %p688 = pneg %p209
        $region26: #{tpu_custom_call.1} parent=11 // pred_check_branch
          %690 = sbr.rel (%p688) target = $region28
        $region27: #{tpu_custom_call.1} parent=11 // pred_region
          %692 = vsyncadd [#allocation9], 0
          %s693 = sshll.u32 %s6, 4
          %s694 = int_to_ptr.hbm [resolvable:$true] %s693
          %s695 = sshll.u32 [#allocation8], 4
          %s696 = int_to_ptr.vmem [resolvable:$true] %s695
          %701 = dma.hbm_to_vmem [thread:$0]  %s694, 512, %s696, [#allocation9], 128, 128, 8
        $region28: #{tpu_custom_call.1} parent=11 // pred_fallthru
          _
        // Predicated region
        $region29: #{tpu_custom_call.1} parent=11 // pred_check
          %p702 = pneg %p230
        $region30: #{tpu_custom_call.1} parent=11 // pred_check_branch
          %704 = sbr.rel (%p702) target = $region32
        $region31: #{tpu_custom_call.1} parent=11 // pred_region
          %706 = vsyncadd [#allocation9], 0
          %s707 = sshll.u32 %s7, 4
          %s708 = int_to_ptr.hbm [resolvable:$true] %s707
          %s709 = sshll.u32 [#allocation10], 4
          %s710 = int_to_ptr.vmem [resolvable:$true] %s709
          %715 = dma.hbm_to_vmem [thread:$0]  %s708, 512, %s710, [#allocation9], 128, 128, 8
        $region32: #{tpu_custom_call.1} parent=11 // pred_fallthru
          _
        // Predicated region
        $region33: #{tpu_custom_call.1} parent=11 // pred_check
          %p716 = pneg %p251
        $region34: #{tpu_custom_call.1} parent=11 // pred_check_branch
          %718 = sbr.rel (%p716) target = $region36
        $region35: #{tpu_custom_call.1} parent=11 // pred_region
          _
        $region36: #{tpu_custom_call.1} parent=11 // pred_fallthru
          _
        // Predicated region
        $region37: #{tpu_custom_call.1} parent=11 // pred_check
          %p719 = pneg %p272
        $region38: #{tpu_custom_call.1} parent=11 // pred_check_branch
          %721 = sbr.rel (%p719) target = $region40
        $region39: #{tpu_custom_call.1} parent=11 // pred_region
          _
        $region40: #{tpu_custom_call.1} parent=11 // pred_fallthru
          _
        // Predicated region
        $region41: #{tpu_custom_call.1} parent=11 // pred_check
          %p722 = pneg %p293
        $region42: #{tpu_custom_call.1} parent=11 // pred_check_branch
          %724 = sbr.rel (%p722) target = $region44
        $region43: #{tpu_custom_call.1} parent=11 // pred_region
          _
        $region44: #{tpu_custom_call.1} parent=11 // pred_fallthru
          _
        // Predicated region
        $region45: #{tpu_custom_call.1} parent=11 // pred_check
          %p725 = pneg %p314
        $region46: #{tpu_custom_call.1} parent=11 // pred_check_branch
          %727 = sbr.rel (%p725) target = $region48
        $region47: #{tpu_custom_call.1} parent=11 // pred_region
          _
        $region48: #{tpu_custom_call.1} parent=11 // pred_fallthru
          _
        // Predicated region
        $region49: #{tpu_custom_call.1} parent=11 // pred_check
          %p728 = pneg %p335
        $region50: #{tpu_custom_call.1} parent=11 // pred_check_branch
          %730 = sbr.rel (%p728) target = $region52
        $region51: #{tpu_custom_call.1} parent=11 // pred_region
          _
        $region52: #{tpu_custom_call.1} parent=11 // pred_fallthru
          _
        // Predicated region
        $region53: #{tpu_custom_call.1} parent=11 // pred_check
          %p731 = pneg %p356
        $region54: #{tpu_custom_call.1} parent=11 // pred_check_branch
          %733 = sbr.rel (%p731) target = $region56
        $region55: #{tpu_custom_call.1} parent=11 // pred_region
          %735 = vsyncadd [#allocation12], 0
          %s736 = sshll.u32 %s13, 4
          %s737 = int_to_ptr.hbm [resolvable:$true] %s736
          %s738 = sshll.u32 [#allocation11], 4
          %s739 = int_to_ptr.vmem [resolvable:$true] %s738
          %744 = dma.hbm_to_vmem [thread:$0]  %s737, 512, %s739, [#allocation12], 128, 128, 8
        $region56: #{tpu_custom_call.1} parent=11 // pred_fallthru
          _
        // Predicated region
        $region57: #{tpu_custom_call.1} parent=11 // pred_check
          %p745 = pneg %p377
        $region58: #{tpu_custom_call.1} parent=11 // pred_check_branch
          %747 = sbr.rel (%p745) target = $region60
        $region59: #{tpu_custom_call.1} parent=11 // pred_region
          %749 = vsyncadd [#allocation12], 0
          %s750 = sshll.u32 %s14, 4
          %s751 = int_to_ptr.hbm [resolvable:$true] %s750
          %s752 = sshll.u32 [#allocation13], 4
          %s753 = int_to_ptr.vmem [resolvable:$true] %s752
          %758 = dma.hbm_to_vmem [thread:$0]  %s751, 512, %s753, [#allocation12], 128, 128, 8
        $region60: #{tpu_custom_call.1} parent=11 // pred_fallthru
          _
        // Predicated region
        $region61: #{tpu_custom_call.1} parent=11 // pred_check
          %p759 = pneg %p398
        $region62: #{tpu_custom_call.1} parent=11 // pred_check_branch
          %761 = sbr.rel (%p759) target = $region64
        $region63: #{tpu_custom_call.1} parent=11 // pred_region
          %763 = vsyncadd [#allocation15], 0
          %s764 = sshll.u32 %s15, 4
          %s765 = int_to_ptr.hbm [resolvable:$true] %s764
          %s766 = sshll.u32 [#allocation14], 4
          %s767 = int_to_ptr.vmem [resolvable:$true] %s766
          %772 = dma.hbm_to_vmem [thread:$0]  %s765, 512, %s767, [#allocation15], 128, 128, 8
        $region64: #{tpu_custom_call.1} parent=11 // pred_fallthru
          _
        // Predicated region
        $region65: #{tpu_custom_call.1} parent=11 // pred_check
          %p773 = pneg %p419
        $region66: #{tpu_custom_call.1} parent=11 // pred_check_branch
          %775 = sbr.rel (%p773) target = $region68
        $region67: #{tpu_custom_call.1} parent=11 // pred_region
          _
        $region68: #{tpu_custom_call.1} parent=11 // pred_fallthru
          _
        // Predicated region
        $region69: #{tpu_custom_call.1} parent=11 // pred_check
          %p776 = pneg %p440
        $region70: #{tpu_custom_call.1} parent=11 // pred_check_branch
          %778 = sbr.rel (%p776) target = $region72
        $region71: #{tpu_custom_call.1} parent=11 // pred_region
          _
        $region72: #{tpu_custom_call.1} parent=11 // pred_fallthru
          _
        // Predicated region
        $region73: #{tpu_custom_call.1} parent=11 // pred_check
          %p779 = pneg %p461
        $region74: #{tpu_custom_call.1} parent=11 // pred_check_branch
          %781 = sbr.rel (%p779) target = $region76
        $region75: #{tpu_custom_call.1} parent=11 // pred_region
          _
        $region76: #{tpu_custom_call.1} parent=11 // pred_fallthru
          _
        // Predicated region
        $region77: #{tpu_custom_call.1} parent=11 // pred_check
          %p782 = pneg %p482
        $region78: #{tpu_custom_call.1} parent=11 // pred_check_branch
          %784 = sbr.rel (%p782) target = $region80
        $region79: #{tpu_custom_call.1} parent=11 // pred_region
          %786 = vsyncadd [#allocation15], 0
          %s787 = sshll.u32 %s19, 4
          %s788 = int_to_ptr.hbm [resolvable:$true] %s787
          %s789 = sshll.u32 [#allocation16], 4
          %s790 = int_to_ptr.vmem [resolvable:$true] %s789
          %795 = dma.hbm_to_vmem [thread:$0]  %s788, 512, %s790, [#allocation15], 128, 128, 8
        $region80: #{tpu_custom_call.1} parent=11 // pred_fallthru
          _
        // Predicated region
        $region81: #{tpu_custom_call.1} parent=11 // pred_check
          %p796 = pneg %p503
        $region82: #{tpu_custom_call.1} parent=11 // pred_check_branch
          %798 = sbr.rel (%p796) target = $region84
        $region83: #{tpu_custom_call.1} parent=11 // pred_region
          %800 = vsyncadd [#allocation18], 0
          %s801 = sshll.u32 %s20, 4
          %s802 = int_to_ptr.hbm [resolvable:$true] %s801
          %s803 = sshll.u32 [#allocation17], 4
          %s804 = int_to_ptr.vmem [resolvable:$true] %s803
          %809 = dma.hbm_to_vmem [thread:$0]  %s802, 512, %s804, [#allocation18], 128, 128, 8
        $region84: #{tpu_custom_call.1} parent=11 // pred_fallthru
          _
        // Predicated region
        $region85: #{tpu_custom_call.1} parent=11 // pred_check
          %p810 = pneg %p524
        $region86: #{tpu_custom_call.1} parent=11 // pred_check_branch
          %812 = sbr.rel (%p810) target = $region88
        $region87: #{tpu_custom_call.1} parent=11 // pred_region
          %814 = vsyncadd [#allocation18], 0
          %s815 = sshll.u32 %s21, 4
          %s816 = int_to_ptr.hbm [resolvable:$true] %s815
          %s817 = sshll.u32 [#allocation19], 4
          %s818 = int_to_ptr.vmem [resolvable:$true] %s817
          %823 = dma.hbm_to_vmem [thread:$0]  %s816, 512, %s818, [#allocation18], 128, 128, 8
        $region88: #{tpu_custom_call.1} parent=11 // pred_fallthru
          _
        // Predicated region
        $region89: #{tpu_custom_call.1} parent=11 // pred_check
          %p824 = pneg %p545
        $region90: #{tpu_custom_call.1} parent=11 // pred_check_branch
          %826 = sbr.rel (%p824) target = $region92
        $region91: #{tpu_custom_call.1} parent=11 // pred_region
          _
        $region92: #{tpu_custom_call.1} parent=11 // pred_fallthru
          _
        // Predicated region
        $region93: #{tpu_custom_call.1} parent=11 // pred_check
          %p827 = pneg %p566
        $region94: #{tpu_custom_call.1} parent=11 // pred_check_branch
          %829 = sbr.rel (%p827) target = $region96
        $region95: #{tpu_custom_call.1} parent=11 // pred_region
          _
        $region96: #{tpu_custom_call.1} parent=11 // pred_fallthru
          _
        // Predicated region
        $region97: #{tpu_custom_call.1} parent=11 // pred_check
          %p830 = pneg %p587
        $region98: #{tpu_custom_call.1} parent=11 // pred_check_branch
          %832 = sbr.rel (%p830) target = $region100
        $region99: #{tpu_custom_call.1} parent=11 // pred_region
          _
        $region100: #{tpu_custom_call.1} parent=11 // pred_fallthru
          _
        // Predicated region
        $region101: #{tpu_custom_call.1} parent=11 // pred_check
          %p833 = pneg %p608
        $region102: #{tpu_custom_call.1} parent=11 // pred_check_branch
          %835 = sbr.rel (%p833) target = $region104
        $region103: #{tpu_custom_call.1} parent=11 // pred_region
          %837 = vsyncadd [#allocation21], 0
          %s838 = sshll.u32 %s25, 4
          %s839 = int_to_ptr.hbm [resolvable:$true] %s838
          %s840 = sshll.u32 [#allocation20], 4
          %s841 = int_to_ptr.vmem [resolvable:$true] %s840
          %846 = dma.hbm_to_vmem [thread:$0]  %s839, 512, %s841, [#allocation21], 128, 128, 8
        $region104: #{tpu_custom_call.1} parent=11 // pred_fallthru
          _
        // Predicated region
        $region105: #{tpu_custom_call.1} parent=11 // pred_check
          %p847 = pneg %p629
        $region106: #{tpu_custom_call.1} parent=11 // pred_check_branch
          %849 = sbr.rel (%p847) target = $region108
        $region107: #{tpu_custom_call.1} parent=11 // pred_region
          _
        $region108: #{tpu_custom_call.1} parent=11 // pred_fallthru
          _
      $region12: #{tpu_custom_call.1} parent=5 // pred_fallthru
        _
      %p850 = scmp.lt.s32.totalorder %s47, 2
      // Predicated region
      $region109: #{tpu_custom_call.1} parent=5 // pred_check
        %p851 = pneg %p850
      $region110: #{tpu_custom_call.1} parent=5 // pred_check_branch
        %853 = sbr.rel (%p851) target = $region112
      $region111: #{tpu_custom_call.1} parent=5 // pred_region
        // Predicated region
        $region113: #{tpu_custom_call.1} parent=111 // pred_check
          %p854 = pneg %p67
        $region114: #{tpu_custom_call.1} parent=111 // pred_check_branch
          %856 = sbr.rel (%p854) target = $region116
        $region115: #{tpu_custom_call.1} parent=111 // pred_region
          %s857 = sand.u32 %s57, 1
          %s858 = scalar_lea.sflag [#allocation3], %s857
          %s859 = sand.u32 %s57, 1
          %s860 = smul.addr %s859, 8
          %s861 = scalar_lea.vmem [#allocation2], %s860
          %863 = vsyncadd %s858, 0
          %s864 = smul.addr %s47, 8
          %s865 = scalar_lea.hbm %s0, %s864
          %s867 = sshll.u32 %s865, 4
          %s868 = int_to_ptr.hbm [resolvable:$true] %s867
          %s869 = sshll.u32 %s861, 4
          %s870 = int_to_ptr.vmem [resolvable:$true] %s869
          %872 = dma.hbm_to_vmem [thread:$0]  %s868, 128, %s870, %s858
        $region116: #{tpu_custom_call.1} parent=111 // pred_fallthru
          _
        // Predicated region
        $region117: #{tpu_custom_call.1} parent=111 // pred_check
          %p873 = pneg %p93
        $region118: #{tpu_custom_call.1} parent=111 // pred_check_branch
          %875 = sbr.rel (%p873) target = $region120
        $region119: #{tpu_custom_call.1} parent=111 // pred_region
          %s876 = sand.u32 %s47, 1
          %s877 = scalar_lea.sflag [#allocation6], %s876
          %s878 = sand.u32 %s83, 1
          %s879 = smul.addr %s878, 8
          %s880 = scalar_lea.vmem [#allocation5], %s879
          %882 = vsyncadd %s877, 0
          %s883 = smul.addr %s47, 8
          %s884 = scalar_lea.hbm %s1, %s883
          %s886 = sshll.u32 %s884, 4
          %s887 = int_to_ptr.hbm [resolvable:$true] %s886
          %s888 = sshll.u32 %s880, 4
          %s889 = int_to_ptr.vmem [resolvable:$true] %s888
          %891 = dma.hbm_to_vmem [thread:$0]  %s887, 128, %s889, %s877
        $region120: #{tpu_custom_call.1} parent=111 // pred_fallthru
          _
        // Predicated region
        $region121: #{tpu_custom_call.1} parent=111 // pred_check
          %p892 = pneg %p119
        $region122: #{tpu_custom_call.1} parent=111 // pred_check_branch
          %894 = sbr.rel (%p892) target = $region124
        $region123: #{tpu_custom_call.1} parent=111 // pred_region
          %p895 = scmp.lt.s32.totalorder %s47, 1
          %s896 = scalar_select %p895, %s47, 1
          %s897 = smul.addr %s896, 8
          %s898 = scalar_lea.vmem %s2, %s897
        $region124: #{tpu_custom_call.1} parent=111 // pred_fallthru
          _
      $region112: #{tpu_custom_call.1} parent=5 // pred_fallthru
        _
      %p899 = scmp.le.s32.totalorder 1, %s47
      %p900 = scmp.lt.s32.totalorder %s47, 3
      %p901 = pnand %p899, %p900
      %p902 = pneg %p901
      // Predicated region
      $region125: #{tpu_custom_call.1} parent=5 // pred_check
        _
      $region126: #{tpu_custom_call.1} parent=5 // pred_check_branch
        %904 = sbr.rel (%p901) target = $region128
      $region127: #{tpu_custom_call.1} parent=5 // pred_region
        %s905 = ssub.s32 %s47, 1
        %s906 = sand.u32 %s60, 1
        %s907 = scalar_lea.sflag [#allocation3], %s906
        %s908 = sand.u32 %s60, 1
        %s909 = smul.addr %s908, 8
        %s910 = scalar_lea.vmem [#allocation2], %s909
        // Predicated region
        $region129: #{tpu_custom_call.1} parent=127 // pred_check
          %p911 = pneg %p73
        $region130: #{tpu_custom_call.1} parent=127 // pred_check_branch
          %913 = sbr.rel (%p911) target = $region132
        $region131: #{tpu_custom_call.1} parent=127 // pred_region
          %915 = dma.done %s907, 128
        $region132: #{tpu_custom_call.1} parent=127 // pred_fallthru
          _
        %s916 = sand.u32 %s52, 1
        %s917 = scalar_lea.sflag [#allocation6], %s916
        %s918 = sand.u32 %s86, 1
        %s919 = smul.addr %s918, 8
        %s920 = scalar_lea.vmem [#allocation5], %s919
        // Predicated region
        $region133: #{tpu_custom_call.1} parent=127 // pred_check
          %p921 = pneg %p99
        $region134: #{tpu_custom_call.1} parent=127 // pred_check_branch
          %923 = sbr.rel (%p921) target = $region136
        $region135: #{tpu_custom_call.1} parent=127 // pred_region
          %925 = dma.done %s917, 128
        $region136: #{tpu_custom_call.1} parent=127 // pred_fallthru
          _
        // Predicated region
        $region137: #{tpu_custom_call.1} parent=127 // pred_check
          %p926 = pneg %p146
        $region138: #{tpu_custom_call.1} parent=127 // pred_check_branch
          %928 = sbr.rel (%p926) target = $region140
        $region139: #{tpu_custom_call.1} parent=127 // pred_region
          %930 = dma.done [#allocation6], 128
        $region140: #{tpu_custom_call.1} parent=127 // pred_fallthru
          _
        // Predicated region
        $region141: #{tpu_custom_call.1} parent=127 // pred_check
          %p931 = pneg %p209
        $region142: #{tpu_custom_call.1} parent=127 // pred_check_branch
          %933 = sbr.rel (%p931) target = $region144
        $region143: #{tpu_custom_call.1} parent=127 // pred_region
          %935 = dma.done [#allocation9], 512
        $region144: #{tpu_custom_call.1} parent=127 // pred_fallthru
          _
        // Predicated region
        $region145: #{tpu_custom_call.1} parent=127 // pred_check
          %p936 = pneg %p230
        $region146: #{tpu_custom_call.1} parent=127 // pred_check_branch
          %938 = sbr.rel (%p936) target = $region148
        $region147: #{tpu_custom_call.1} parent=127 // pred_region
          %940 = dma.done [#allocation9], 512
        $region148: #{tpu_custom_call.1} parent=127 // pred_fallthru
          _
        // Predicated region
        $region149: #{tpu_custom_call.1} parent=127 // pred_check
          %p941 = pneg %p356
        $region150: #{tpu_custom_call.1} parent=127 // pred_check_branch
          %943 = sbr.rel (%p941) target = $region152
        $region151: #{tpu_custom_call.1} parent=127 // pred_region
          %945 = dma.done [#allocation12], 512
        $region152: #{tpu_custom_call.1} parent=127 // pred_fallthru
          _
        // Predicated region
        $region153: #{tpu_custom_call.1} parent=127 // pred_check
          %p946 = pneg %p377
        $region154: #{tpu_custom_call.1} parent=127 // pred_check_branch
          %948 = sbr.rel (%p946) target = $region156
        $region155: #{tpu_custom_call.1} parent=127 // pred_region
          %950 = dma.done [#allocation12], 512
        $region156: #{tpu_custom_call.1} parent=127 // pred_fallthru
          _
        // Predicated region
        $region157: #{tpu_custom_call.1} parent=127 // pred_check
          %p951 = pneg %p398
        $region158: #{tpu_custom_call.1} parent=127 // pred_check_branch
          %953 = sbr.rel (%p951) target = $region160
        $region159: #{tpu_custom_call.1} parent=127 // pred_region
          %955 = dma.done [#allocation15], 512
        $region160: #{tpu_custom_call.1} parent=127 // pred_fallthru
          _
        // Predicated region
        $region161: #{tpu_custom_call.1} parent=127 // pred_check
          %p956 = pneg %p482
        $region162: #{tpu_custom_call.1} parent=127 // pred_check_branch
          %958 = sbr.rel (%p956) target = $region164
        $region163: #{tpu_custom_call.1} parent=127 // pred_region
          %960 = dma.done [#allocation15], 512
        $region164: #{tpu_custom_call.1} parent=127 // pred_fallthru
          _
        // Predicated region
        $region165: #{tpu_custom_call.1} parent=127 // pred_check
          %p961 = pneg %p503
        $region166: #{tpu_custom_call.1} parent=127 // pred_check_branch
          %963 = sbr.rel (%p961) target = $region168
        $region167: #{tpu_custom_call.1} parent=127 // pred_region
          %965 = dma.done [#allocation18], 512
        $region168: #{tpu_custom_call.1} parent=127 // pred_fallthru
          _
        // Predicated region
        $region169: #{tpu_custom_call.1} parent=127 // pred_check
          %p966 = pneg %p524
        $region170: #{tpu_custom_call.1} parent=127 // pred_check_branch
          %968 = sbr.rel (%p966) target = $region172
        $region171: #{tpu_custom_call.1} parent=127 // pred_region
          %970 = dma.done [#allocation18], 512
        $region172: #{tpu_custom_call.1} parent=127 // pred_fallthru
          _
        // Predicated region
        $region173: #{tpu_custom_call.1} parent=127 // pred_check
          %p971 = pneg %p608
        $region174: #{tpu_custom_call.1} parent=127 // pred_check_branch
          %973 = sbr.rel (%p971) target = $region176
        $region175: #{tpu_custom_call.1} parent=127 // pred_region
          %975 = dma.done [#allocation21], 512
        $region176: #{tpu_custom_call.1} parent=127 // pred_fallthru
          _
        %s976 = sand.u32 %s60, 1
        %s977 = scalar_lea.sflag [#allocation3], %s976
        %s978 = sand.u32 %s60, 1
        %s979 = smul.addr %s978, 8
        %s980 = scalar_lea.vmem [#allocation2], %s979
        %p981 = pneg %p73
        %p982 = pneg %p70
        %s983 = sand.u32 %s52, 1
        %s984 = scalar_lea.sflag [#allocation6], %s983
        %s985 = sand.u32 %s86, 1
        %s986 = smul.addr %s985, 8
        %s987 = scalar_lea.vmem [#allocation5], %s986
        %p988 = pneg %p99
        %p989 = pneg %p96
        %p990 = scmp.lt.s32.totalorder %s52, 1
        %s991 = scalar_select %p990, %s52, 1
        %s992 = smul.addr %s991, 8
        %s993 = scalar_lea.vmem %s2, %s992
        %p994 = pneg %p125
        %p995 = pneg %p122
        %p996 = pneg %p146
        %p997 = pneg %p143
        %p998 = pneg %p167
        %p999 = pneg %p164
        %p1000 = pneg %p188
        %p1001 = pneg %p185
        %p1002 = pneg %p209
        %p1003 = pneg %p206
        %p1004 = pneg %p230
        %p1005 = pneg %p227
        %p1006 = pneg %p251
        %p1007 = pneg %p248
        %p1008 = pneg %p272
        %p1009 = pneg %p269
        %p1010 = pneg %p293
        %p1011 = pneg %p290
        %p1012 = pneg %p314
        %p1013 = pneg %p311
        %p1014 = pneg %p335
        %p1015 = pneg %p332
        %p1016 = pneg %p356
        %p1017 = pneg %p353
        %p1018 = pneg %p377
        %p1019 = pneg %p374
        %p1020 = pneg %p398
        %p1021 = pneg %p395
        %p1022 = pneg %p419
        %p1023 = pneg %p416
        %p1024 = pneg %p440
        %p1025 = pneg %p437
        %p1026 = pneg %p461
        %p1027 = pneg %p458
        %p1028 = pneg %p482
        %p1029 = pneg %p479
        %p1030 = pneg %p503
        %p1031 = pneg %p500
        %p1032 = pneg %p524
        %p1033 = pneg %p521
        %p1034 = pneg %p545
        %p1035 = pneg %p542
        %p1036 = pneg %p566
        %p1037 = pneg %p563
        %p1038 = pneg %p587
        %p1039 = pneg %p584
        %p1040 = pneg %p608
        %p1041 = pneg %p605
        %p1042 = pneg %p629
        %p1043 = pneg %p626
        %p1044 = pneg %p655
        %p1045 = pneg %p652
        %s1046 = sand.u32 %s642, 1
        %s1047 = scalar_lea.sflag [#allocation4], %s1046
        %s1048 = sand.u32 %s642, 1
        %s1049 = smul.addr %s1048, 8
        %s1050 = scalar_lea.vmem [#allocation22], %s1049
        %p1051 = scmp.lt.s32.totalorder %s52, 1
        %s1052 = scalar_select %p1051, %s52, 1
        %s1053 = smul.addr %s1052, 8
        %s1054 = scalar_lea.vmem %s2, %s1053
        %v1055 = vld [vmem:[%s1054] sm:$0xff]
        %v1056 = vld [vmem:[#allocation7] sm:$0x3f]
        %v1057 = vld [vmem:[%s4] sm:$0x1]
        %v1059 = vperm.slane %v1057, 0
        %vm1061 = vcmask 48128
        %v1063 = vsel %vm1061, %v1055, 0
        %vm1065 = vcmask 1045504
        %v1067 = vsel %vm1065, %v1056, 0
        %1069 = vmatpush.msra.mxu0 0.0
        %1070 = vmatpush.msra.mxu0 0.0
        %1071 = vmatpush.msra.mxu0 0.0
        %1072 = vmatpush.msra.mxu0 0.0
        %1073 = vmatpush.msra.mxu0 0.0
        %1074 = vmatpush.msra.mxu0 0.0
        %1075 = vmatpush.msra.mxu0 0.0
        %1076 = vmatpush.msra.mxu0 0.0
        %1077 = vmatpush.msra.mxu0 0.0
        %1078 = vmatpush.msra.mxu0 0.0
        %1079 = vmatpush.msra.mxu0 0.0
        %1080 = vmatpush.msra.mxu0 0.0
        %1081 = vmatpush.msra.mxu0 0.0
        %1082 = vmatpush.msra.mxu0 0.0
        %1083 = vmatpush.msra.mxu0 0.0
        %1084 = vmatpush.msra.mxu0 %v1067
        %1085 = vmatmul.f32.gmra.mxu0 %v1063
        %v1086 = vpop.f32.mrf.mxu0
        %v1087 = vadd.f32 %v1059, %v1086
        %1088 = vdwg.mxu0
        %v1089 = vld [vmem:[%s910] sm:$0xff]
        %v1090 = vld [vmem:[%s5] sm:$0xff]
        %v1091 = vld [vmem:[%s5 + $0x8] sm:$0xff]
        %v1092 = vld [vmem:[%s5 + $0x10] sm:$0xff]
        %v1093 = vld [vmem:[%s5 + $0x18] sm:$0xff]
        %v1094 = vld [vmem:[%s920] sm:$0xff]
        %v1095 = vld [vmem:[#allocation8] sm:$0xff]
        %v1096 = vld [vmem:[#allocation8 + $0x8] sm:$0xff]
        %v1097 = vld [vmem:[#allocation8 + $0x10] sm:$0xff]
        %v1098 = vld [vmem:[#allocation8 + $0x18] sm:$0xff]
        %vm1099 = vcmask 261120
        %v1101 = vsel %vm1099, %v1094, 0
        %1103 = vmatpush.msra.mxu0 0.0
        %1104 = vmatpush.msra.mxu0 0.0
        %1105 = vmatpush.msra.mxu0 0.0
        %1106 = vmatpush.msra.mxu0 0.0
        %1107 = vmatpush.msra.mxu0 0.0
        %1108 = vmatpush.msra.mxu0 0.0
        %1109 = vmatpush.msra.mxu0 0.0
        %1110 = vmatpush.msra.mxu0 0.0
        %1111 = vmatpush.msra.mxu0 0.0
        %1112 = vmatpush.msra.mxu0 0.0
        %1113 = vmatpush.msra.mxu0 0.0
        %1114 = vmatpush.msra.mxu0 0.0
        %1115 = vmatpush.msra.mxu0 %v1098
        %1116 = vmatpush.msra.mxu0 %v1097
        %1117 = vmatpush.msra.mxu0 %v1096
        %1118 = vmatpush.msra.mxu0 %v1095
        %1119 = vmatmul.f32.gmra.mxu0 %v1101
        %v1120 = vpop.f32.mrf.mxu0
        %v1121 = vadd.f32 0.0, %v1120
        %1122 = vdwg.mxu0
        %v1124 = vsel %vm1099, %v1089, 0
        %1126 = vmatpush.msra.mxu0 0.0
        %1127 = vmatpush.msra.mxu0 0.0
        %1128 = vmatpush.msra.mxu0 0.0
        %1129 = vmatpush.msra.mxu0 0.0
        %1130 = vmatpush.msra.mxu0 0.0
        %1131 = vmatpush.msra.mxu0 0.0
        %1132 = vmatpush.msra.mxu0 0.0
        %1133 = vmatpush.msra.mxu0 0.0
        %1134 = vmatpush.msra.mxu0 0.0
        %1135 = vmatpush.msra.mxu0 0.0
        %1136 = vmatpush.msra.mxu0 0.0
        %1137 = vmatpush.msra.mxu0 0.0
        %1138 = vmatpush.msra.mxu0 %v1093
        %1139 = vmatpush.msra.mxu0 %v1092
        %1140 = vmatpush.msra.mxu0 %v1091
        %1141 = vmatpush.msra.mxu0 %v1090
        %1142 = vmatmul.f32.gmra.mxu0 %v1124
        %v1143 = vpop.f32.mrf.mxu0
        %v1144 = vadd.f32 %v1121, %v1143
        %1145 = vdwg.mxu0
        %v1146 = vld [vmem:[#allocation10] sm:$0xff]
        %v1147 = vld [vmem:[#allocation10 + $0x8] sm:$0xff]
        %v1148 = vld [vmem:[#allocation10 + $0x10] sm:$0xff]
        %v1149 = vld [vmem:[#allocation10 + $0x18] sm:$0xff]
        %v1151 = vsel %vm1099, %v1087, 0
        %1153 = vmatpush.msra.mxu0 0.0
        %1154 = vmatpush.msra.mxu0 0.0
        %1155 = vmatpush.msra.mxu0 0.0
        %1156 = vmatpush.msra.mxu0 0.0
        %1157 = vmatpush.msra.mxu0 0.0
        %1158 = vmatpush.msra.mxu0 0.0
        %1159 = vmatpush.msra.mxu0 0.0
        %1160 = vmatpush.msra.mxu0 0.0
        %1161 = vmatpush.msra.mxu0 0.0
        %1162 = vmatpush.msra.mxu0 0.0
        %1163 = vmatpush.msra.mxu0 0.0
        %1164 = vmatpush.msra.mxu0 0.0
        %1165 = vmatpush.msra.mxu0 %v1149
        %1166 = vmatpush.msra.mxu0 %v1148
        %1167 = vmatpush.msra.mxu0 %v1147
        %1168 = vmatpush.msra.mxu0 %v1146
        %1169 = vmatmul.f32.gmra.mxu0 %v1151
        %v1170 = vpop.f32.mrf.mxu0
        %v1171 = vadd.f32 0.0, %v1170
        %1172 = vdwg.mxu0
        %v1173 = vadd.f32 %v1144, %v1171
        %v1174 = vld [vmem:[%s8] sm:$0x1]
        %v1176 = vperm.slane %v1174, 0
        %v1178 = vadd.f32 %v1173, %v1176
        %v1179 = vmax.f32 %v1178, 0.0
        %v1180 = vld [vmem:[%s9] sm:$0xff]
        %v1181 = vld [vmem:[%s9 + $0x8] sm:$0xff]
        %v1182 = vld [vmem:[%s9 + $0x10] sm:$0xff]
        %v1183 = vld [vmem:[%s9 + $0x18] sm:$0xff]
        %v1184 = vld [vmem:[%s9 + $0x20] sm:$0xff]
        %v1185 = vld [vmem:[%s9 + $0x28] sm:$0xff]
        %v1186 = vld [vmem:[%s9 + $0x30] sm:$0xff]
        %v1187 = vld [vmem:[%s9 + $0x38] sm:$0xff]
        %v1188 = vld [vmem:[%s9 + $0x40] sm:$0xff]
        %v1189 = vld [vmem:[%s9 + $0x48] sm:$0xff]
        %v1190 = vld [vmem:[%s9 + $0x50] sm:$0xff]
        %v1191 = vld [vmem:[%s9 + $0x58] sm:$0xff]
        %v1192 = vld [vmem:[%s10] sm:$0x1]
        %v1194 = vperm.slane %v1192, 0
        %vm1196 = vcmask 785408
        %v1198 = vsel %vm1196, %v1179, 0
        %1200 = vmatpush.msra.mxu0 0.0
        %1201 = vmatpush.msra.mxu0 0.0
        %1202 = vmatpush.msra.mxu0 0.0
        %1203 = vmatpush.msra.mxu0 0.0
        %1204 = vmatpush.msra.mxu0 %v1191
        %1205 = vmatpush.msra.mxu0 %v1190
        %1206 = vmatpush.msra.mxu0 %v1189
        %1207 = vmatpush.msra.mxu0 %v1188
        %1208 = vmatpush.msra.mxu0 %v1187
        %1209 = vmatpush.msra.mxu0 %v1186
        %1210 = vmatpush.msra.mxu0 %v1185
        %1211 = vmatpush.msra.mxu0 %v1184
        %1212 = vmatpush.msra.mxu0 %v1183
        %1213 = vmatpush.msra.mxu0 %v1182
        %1214 = vmatpush.msra.mxu0 %v1181
        %1215 = vmatpush.msra.mxu0 %v1180
        %1216 = vmatmul.f32.gmra.mxu0 %v1198
        %v1217 = vpop.f32.mrf.mxu0
        %v1218 = vadd.f32 %v1194, %v1217
        %1219 = vdwg.mxu0
        %v1220 = vmax.f32 %v1218, 0.0
        %v1221 = vld [vmem:[%s11] sm:$0xff]
        %v1222 = vld [vmem:[%s11 + $0x8] sm:$0xff]
        %v1223 = vld [vmem:[%s11 + $0x10] sm:$0xff]
        %v1224 = vld [vmem:[%s11 + $0x18] sm:$0xff]
        %v1225 = vld [vmem:[%s11 + $0x20] sm:$0xff]
        %v1226 = vld [vmem:[%s11 + $0x28] sm:$0xff]
        %v1227 = vld [vmem:[%s11 + $0x30] sm:$0xff]
        %v1228 = vld [vmem:[%s11 + $0x38] sm:$0xff]
        %v1229 = vld [vmem:[%s11 + $0x40] sm:$0xff]
        %v1230 = vld [vmem:[%s11 + $0x48] sm:$0xff]
        %v1231 = vld [vmem:[%s11 + $0x50] sm:$0xff]
        %v1232 = vld [vmem:[%s11 + $0x58] sm:$0xff]
        %v1233 = vld [vmem:[%s12] sm:$0x1]
        %v1235 = vperm.slane %v1233, 0
        %v1238 = vsel %vm1196, %v1220, 0
        %1240 = vmatpush.msra.mxu0 0.0
        %1241 = vmatpush.msra.mxu0 0.0
        %1242 = vmatpush.msra.mxu0 0.0
        %1243 = vmatpush.msra.mxu0 0.0
        %1244 = vmatpush.msra.mxu0 %v1232
        %1245 = vmatpush.msra.mxu0 %v1231
        %1246 = vmatpush.msra.mxu0 %v1230
        %1247 = vmatpush.msra.mxu0 %v1229
        %1248 = vmatpush.msra.mxu0 %v1228
        %1249 = vmatpush.msra.mxu0 %v1227
        %1250 = vmatpush.msra.mxu0 %v1226
        %1251 = vmatpush.msra.mxu0 %v1225
        %1252 = vmatpush.msra.mxu0 %v1224
        %1253 = vmatpush.msra.mxu0 %v1223
        %1254 = vmatpush.msra.mxu0 %v1222
        %1255 = vmatpush.msra.mxu0 %v1221
        %1256 = vmatmul.f32.gmra.mxu0 %v1238
        %v1257 = vpop.f32.mrf.mxu0
        %v1258 = vadd.f32 %v1235, %v1257
        %1259 = vdwg.mxu0
        %v1260 = vld [vmem:[#allocation11] sm:$0xff]
        %v1261 = vld [vmem:[#allocation11 + $0x8] sm:$0xff]
        %v1262 = vld [vmem:[#allocation11 + $0x10] sm:$0xff]
        %v1263 = vld [vmem:[#allocation11 + $0x18] sm:$0xff]
        %v1264 = vld [vmem:[#allocation13] sm:$0xff]
        %v1265 = vld [vmem:[#allocation13 + $0x8] sm:$0xff]
        %v1266 = vld [vmem:[#allocation13 + $0x10] sm:$0xff]
        %v1267 = vld [vmem:[#allocation13 + $0x18] sm:$0xff]
        %v1268 = vld [vmem:[#allocation14] sm:$0xff]
        %v1269 = vld [vmem:[#allocation14 + $0x8] sm:$0xff]
        %v1270 = vld [vmem:[#allocation14 + $0x10] sm:$0xff]
        %v1271 = vld [vmem:[#allocation14 + $0x18] sm:$0xff]
        %v1272 = vld [vmem:[%s16] sm:$0x1]
        %v1273 = vld [vmem:[%s17] sm:$0x1]
        %v1274 = vld [vmem:[%s18] sm:$0x1]
        %v1276 = vsel %vm1099, %v1258, 0
        %1278 = vmatpush.msra.mxu0 0.0
        %1279 = vmatpush.msra.mxu0 0.0
        %1280 = vmatpush.msra.mxu0 0.0
        %1281 = vmatpush.msra.mxu0 0.0
        %1282 = vmatpush.msra.mxu0 0.0
        %1283 = vmatpush.msra.mxu0 0.0
        %1284 = vmatpush.msra.mxu0 0.0
        %1285 = vmatpush.msra.mxu0 0.0
        %1286 = vmatpush.msra.mxu0 0.0
        %1287 = vmatpush.msra.mxu0 0.0
        %1288 = vmatpush.msra.mxu0 0.0
        %1289 = vmatpush.msra.mxu0 0.0
        %1290 = vmatpush.msra.mxu0 %v1263
        %1291 = vmatpush.msra.mxu0 %v1262
        %1292 = vmatpush.msra.mxu0 %v1261
        %1293 = vmatpush.msra.mxu0 %v1260
        %1294 = vmatmul.f32.gmra.mxu0 %v1276
        %v1295 = vpop.f32.mrf.mxu0
        %v1296 = vadd.f32 0.0, %v1295
        %1297 = vdwg.mxu0
        %v1299 = vperm.slane %v1272, 0
        %1301 = vmatpush.msra.mxu0 0.0
        %1302 = vmatpush.msra.mxu0 0.0
        %1303 = vmatpush.msra.mxu0 0.0
        %1304 = vmatpush.msra.mxu0 0.0
        %1305 = vmatpush.msra.mxu0 0.0
        %1306 = vmatpush.msra.mxu0 0.0
        %1307 = vmatpush.msra.mxu0 0.0
        %1308 = vmatpush.msra.mxu0 0.0
        %1309 = vmatpush.msra.mxu0 0.0
        %1310 = vmatpush.msra.mxu0 0.0
        %1311 = vmatpush.msra.mxu0 0.0
        %1312 = vmatpush.msra.mxu0 0.0
        %1313 = vmatpush.msra.mxu0 %v1267
        %1314 = vmatpush.msra.mxu0 %v1266
        %1315 = vmatpush.msra.mxu0 %v1265
        %1316 = vmatpush.msra.mxu0 %v1264
        %1317 = vmatmul.f32.gmra.mxu0 %v1276
        %v1318 = vpop.f32.mrf.mxu0
        %v1319 = vadd.f32 %v1299, %v1318
        %1320 = vdwg.mxu0
        %1322 = vrot.lane.b32.xlu0 %v1296, 64
        %v1323 = vpop.permute.xlu0 %1322
        %vm1324 = vcmask 130048
        %v1325 = vsel %vm1324, %v1323, 0
        %v1327 = vsel %vm1324, %v1296, 0
        %1329 = vmatpush.xpose.msra.mxu0 0.0
        %1330 = vmatpush.xpose.msra.mxu0 0.0
        %1331 = vmatpush.xpose.msra.mxu0 0.0
        %1332 = vmatpush.xpose.msra.mxu0 0.0
        %1333 = vmatpush.xpose.msra.mxu0 0.0
        %1334 = vmatpush.xpose.msra.mxu0 0.0
        %1335 = vmatpush.xpose.msra.mxu0 0.0
        %1336 = vmatpush.xpose.msra.mxu0 0.0
        %1337 = vmatpush.xpose.msra.mxu0 0.0
        %1338 = vmatpush.xpose.msra.mxu0 0.0
        %1339 = vmatpush.xpose.msra.mxu0 0.0
        %1340 = vmatpush.xpose.msra.mxu0 0.0
        %1341 = vmatpush.xpose.msra.mxu0 0.0
        %1342 = vmatpush.xpose.msra.mxu0 0.0
        %1343 = vmatpush.xpose.msra.mxu0 0.0
        %1344 = vmatpush.xpose.msra.mxu0 %v1327
        %1345 = vmatmul.f32.gmra.mxu0 %v1325
        %v1346 = vpop.f32.mrf.mxu0
        %v1347 = vadd.f32 0.0, %v1346
        %1348 = vdwg.mxu0
        %v1349 = vmul.f32 %v1347, 0.25
        %vm1350 = vcmask 64512
        %v1351 = vsel %vm1350, %v1349, -inf
        %1352 = vmax.xlane.f32.xlu0 %v1351
        %v1353 = vpop.xlane.xlu0 %1352
        %v1354 = vsub.f32 %v1349, %v1353
        %v1355 = vmul.f32 %v1354, 1.442695
        %v1356 = vpow.pop %v1355
        %v1357 = vsel %vm1350, %v1356, 0.0
        %1358 = vadd.xlane.f32.xlu0 %v1357
        %v1359 = vpop.xlane.xlu0 %1358
        %v1360 = vrcp.pop %v1359
        %v1361 = vmul.f32 %v1356, %v1360
        %1362 = vrot.lane.b32.xlu0 %v1296, 96
        %v1363 = vpop.permute.xlu0 %1362
        %v1366 = vsel %vm1350, %v1361, 0
        %1368 = vmatpush.msra.mxu0 0.0
        %1369 = vmatpush.msra.mxu0 0.0
        %1370 = vmatpush.msra.mxu0 0.0
        %1371 = vmatpush.msra.mxu0 0.0
        %1372 = vmatpush.msra.mxu0 0.0
        %1373 = vmatpush.msra.mxu0 0.0
        %1374 = vmatpush.msra.mxu0 0.0
        %1375 = vmatpush.msra.mxu0 0.0
        %1376 = vmatpush.msra.mxu0 0.0
        %1377 = vmatpush.msra.mxu0 0.0
        %1378 = vmatpush.msra.mxu0 0.0
        %1379 = vmatpush.msra.mxu0 0.0
        %1380 = vmatpush.msra.mxu0 0.0
        %1381 = vmatpush.msra.mxu0 0.0
        %1382 = vmatpush.msra.mxu0 0.0
        %1383 = vmatpush.msra.mxu0 %v1363
        %1384 = vmatmul.f32.gmra.mxu0 %v1366
        %v1385 = vpop.f32.mrf.mxu0
        %v1386 = vadd.f32 0.0, %v1385
        %1387 = vdwg.mxu0
        %v1389 = vsel %vm1324, %v1386, 0
        %1391 = vmatpush.msra.mxu0 0.0
        %1392 = vmatpush.msra.mxu0 0.0
        %1393 = vmatpush.msra.mxu0 0.0
        %1394 = vmatpush.msra.mxu0 0.0
        %1395 = vmatpush.msra.mxu0 0.0
        %1396 = vmatpush.msra.mxu0 0.0
        %1397 = vmatpush.msra.mxu0 0.0
        %1398 = vmatpush.msra.mxu0 0.0
        %1399 = vmatpush.msra.mxu0 0.0
        %1400 = vmatpush.msra.mxu0 0.0
        %1401 = vmatpush.msra.mxu0 0.0
        %1402 = vmatpush.msra.mxu0 0.0
        %1403 = vmatpush.msra.mxu0 0.0
        %1404 = vmatpush.msra.mxu0 0.0
        %1405 = vmatpush.msra.mxu0 %v1269
        %1406 = vmatpush.msra.mxu0 %v1268
        %1407 = vmatmul.f32.gmra.mxu0 %v1389
        %v1408 = vpop.f32.mrf.mxu0
        %v1409 = vadd.f32 0.0, %v1408
        %1410 = vdwg.mxu0
        %v1411 = vadd.f32 %v1319, %v1409
        %1412 = vrot.lane.b32.xlu0 %v1296, 48
        %v1413 = vpop.permute.xlu0 %1412
        %1414 = vrot.lane.b32.xlu0 %v1296, 112
        %v1415 = vpop.permute.xlu0 %1414
        %v1416 = vsel %vm1324, %v1413, 0
        %v1418 = vsel %vm1324, %v1415, 0
        %1420 = vmatpush.xpose.msra.mxu0 0.0
        %1421 = vmatpush.xpose.msra.mxu0 0.0
        %1422 = vmatpush.xpose.msra.mxu0 0.0
        %1423 = vmatpush.xpose.msra.mxu0 0.0
        %1424 = vmatpush.xpose.msra.mxu0 0.0
        %1425 = vmatpush.xpose.msra.mxu0 0.0
        %1426 = vmatpush.xpose.msra.mxu0 0.0
        %1427 = vmatpush.xpose.msra.mxu0 0.0
        %1428 = vmatpush.xpose.msra.mxu0 0.0
        %1429 = vmatpush.xpose.msra.mxu0 0.0
        %1430 = vmatpush.xpose.msra.mxu0 0.0
        %1431 = vmatpush.xpose.msra.mxu0 0.0
        %1432 = vmatpush.xpose.msra.mxu0 0.0
        %1433 = vmatpush.xpose.msra.mxu0 0.0
        %1434 = vmatpush.xpose.msra.mxu0 0.0
        %1435 = vmatpush.xpose.msra.mxu0 %v1418
        %1436 = vmatmul.f32.gmra.mxu0 %v1416
        %v1437 = vpop.f32.mrf.mxu0
        %v1438 = vadd.f32 0.0, %v1437
        %1439 = vdwg.mxu0
        %v1440 = vmul.f32 %v1438, 0.25
        %v1441 = vsel %vm1350, %v1440, -inf
        %1442 = vmax.xlane.f32.xlu0 %v1441
        %v1443 = vpop.xlane.xlu0 %1442
        %v1444 = vsub.f32 %v1440, %v1443
        %v1445 = vmul.f32 %v1444, 1.442695
        %v1446 = vpow.pop %v1445
        %v1447 = vsel %vm1350, %v1446, 0.0
        %1448 = vadd.xlane.f32.xlu0 %v1447
        %v1449 = vpop.xlane.xlu0 %1448
        %v1450 = vrcp.pop %v1449
        %v1451 = vmul.f32 %v1446, %v1450
        %1452 = vrot.lane.b32.xlu0 %v1296, 80
        %v1453 = vpop.permute.xlu0 %1452
        %v1456 = vsel %vm1350, %v1451, 0
        %1458 = vmatpush.msra.mxu0 0.0
        %1459 = vmatpush.msra.mxu0 0.0
        %1460 = vmatpush.msra.mxu0 0.0
        %1461 = vmatpush.msra.mxu0 0.0
        %1462 = vmatpush.msra.mxu0 0.0
        %1463 = vmatpush.msra.mxu0 0.0
        %1464 = vmatpush.msra.mxu0 0.0
        %1465 = vmatpush.msra.mxu0 0.0
        %1466 = vmatpush.msra.mxu0 0.0
        %1467 = vmatpush.msra.mxu0 0.0
        %1468 = vmatpush.msra.mxu0 0.0
        %1469 = vmatpush.msra.mxu0 0.0
        %1470 = vmatpush.msra.mxu0 0.0
        %1471 = vmatpush.msra.mxu0 0.0
        %1472 = vmatpush.msra.mxu0 0.0
        %1473 = vmatpush.msra.mxu0 %v1453
        %1474 = vmatmul.f32.gmra.mxu0 %v1456
        %v1475 = vpop.f32.mrf.mxu0
        %v1476 = vadd.f32 0.0, %v1475
        %1477 = vdwg.mxu0
        %v1479 = vsel %vm1324, %v1476, 0
        %1481 = vmatpush.msra.mxu0 0.0
        %1482 = vmatpush.msra.mxu0 0.0
        %1483 = vmatpush.msra.mxu0 0.0
        %1484 = vmatpush.msra.mxu0 0.0
        %1485 = vmatpush.msra.mxu0 0.0
        %1486 = vmatpush.msra.mxu0 0.0
        %1487 = vmatpush.msra.mxu0 0.0
        %1488 = vmatpush.msra.mxu0 0.0
        %1489 = vmatpush.msra.mxu0 0.0
        %1490 = vmatpush.msra.mxu0 0.0
        %1491 = vmatpush.msra.mxu0 0.0
        %1492 = vmatpush.msra.mxu0 0.0
        %1493 = vmatpush.msra.mxu0 0.0
        %1494 = vmatpush.msra.mxu0 0.0
        %1495 = vmatpush.msra.mxu0 %v1271
        %1496 = vmatpush.msra.mxu0 %v1270
        %1497 = vmatmul.f32.gmra.mxu0 %v1479
        %v1498 = vpop.f32.mrf.mxu0
        %v1499 = vadd.f32 0.0, %v1498
        %1500 = vdwg.mxu0
        %v1501 = vadd.f32 %v1411, %v1499
        %v1502 = vadd.f32 %v1501, %v1258
        %v1503 = vsel %vm1099, %v1502, 0.0
        %1504 = vadd.xlane.f32.xlu0 %v1503
        %v1505 = vpop.xlane.xlu0 %1504
        %v1506 = vrcp.pop 32.0
        %v1507 = vmul.f32 32.0, %v1506
        %v1508 = vsub.f32 1.0, %v1507
        %v1509 = vmul.f32 %v1506, %v1508
        %v1510 = vadd.f32 %v1506, %v1509
        %vm1511 = vweird.f32 %v1506
        %v1512 = vsel %vm1511, %v1506, %v1510
        %v1513 = vmul.f32 %v1505, %v1512
        %v1514 = vsub.f32 %v1502, %v1513
        %v1515 = vmul.f32 %v1514, %v1514
        %v1516 = vsel %vm1099, %v1515, 0.0
        %1517 = vadd.xlane.f32.xlu0 %v1516
        %v1518 = vpop.xlane.xlu0 %1517
        %v1519 = vmul.f32 %v1518, %v1512
        %v1520 = vadd.f32 %v1519, 1e-05
        %v1521 = vrsqrt.pop %v1520
        %v1522 = vmul.f32 %v1521, %v1520
        %v1523 = vmul.f32 %v1522, %v1521
        %v1524 = vmul.f32 0.5, %v1523
        %v1525 = vsub.f32 1.5, %v1524
        %v1526 = vmul.f32 %v1521, %v1525
        %vm1527 = vweird.f32 %v1520
        %vm1528 = vweird.f32 %v1521
        %vm1529 = vmor %vm1527, %vm1528
        %v1530 = vsel %vm1529, %v1521, %v1526
        %v1531 = vmul.f32 %v1514, %v1530
        %v1533 = vperm.slane %v1273, 0
        %v1535 = vmul.f32 %v1531, %v1533
        %v1537 = vperm.slane %v1274, 0
        %v1539 = vadd.f32 %v1535, %v1537
        %v1540 = vld [vmem:[#allocation16] sm:$0xff]
        %v1541 = vld [vmem:[#allocation16 + $0x8] sm:$0xff]
        %v1542 = vld [vmem:[#allocation16 + $0x10] sm:$0xff]
        %v1543 = vld [vmem:[#allocation16 + $0x18] sm:$0xff]
        %v1544 = vld [vmem:[#allocation17] sm:$0xff]
        %v1545 = vld [vmem:[#allocation17 + $0x8] sm:$0xff]
        %v1546 = vld [vmem:[#allocation17 + $0x10] sm:$0xff]
        %v1547 = vld [vmem:[#allocation17 + $0x18] sm:$0xff]
        %v1548 = vld [vmem:[#allocation19] sm:$0xff]
        %v1549 = vld [vmem:[#allocation19 + $0x8] sm:$0xff]
        %v1550 = vld [vmem:[#allocation19 + $0x10] sm:$0xff]
        %v1551 = vld [vmem:[#allocation19 + $0x18] sm:$0xff]
        %v1552 = vld [vmem:[%s22] sm:$0x1]
        %v1553 = vld [vmem:[%s23] sm:$0x1]
        %v1554 = vld [vmem:[%s24] sm:$0x1]
        %v1556 = vsel %vm1099, %v1539, 0
        %1558 = vmatpush.msra.mxu0 0.0
        %1559 = vmatpush.msra.mxu0 0.0
        %1560 = vmatpush.msra.mxu0 0.0
        %1561 = vmatpush.msra.mxu0 0.0
        %1562 = vmatpush.msra.mxu0 0.0
        %1563 = vmatpush.msra.mxu0 0.0
        %1564 = vmatpush.msra.mxu0 0.0
        %1565 = vmatpush.msra.mxu0 0.0
        %1566 = vmatpush.msra.mxu0 0.0
        %1567 = vmatpush.msra.mxu0 0.0
        %1568 = vmatpush.msra.mxu0 0.0
        %1569 = vmatpush.msra.mxu0 0.0
        %1570 = vmatpush.msra.mxu0 %v1543
        %1571 = vmatpush.msra.mxu0 %v1542
        %1572 = vmatpush.msra.mxu0 %v1541
        %1573 = vmatpush.msra.mxu0 %v1540
        %1574 = vmatmul.f32.gmra.mxu0 %v1556
        %v1575 = vpop.f32.mrf.mxu0
        %v1576 = vadd.f32 0.0, %v1575
        %1577 = vdwg.mxu0
        %v1579 = vperm.slane %v1552, 0
        %1581 = vmatpush.msra.mxu0 0.0
        %1582 = vmatpush.msra.mxu0 0.0
        %1583 = vmatpush.msra.mxu0 0.0
        %1584 = vmatpush.msra.mxu0 0.0
        %1585 = vmatpush.msra.mxu0 0.0
        %1586 = vmatpush.msra.mxu0 0.0
        %1587 = vmatpush.msra.mxu0 0.0
        %1588 = vmatpush.msra.mxu0 0.0
        %1589 = vmatpush.msra.mxu0 0.0
        %1590 = vmatpush.msra.mxu0 0.0
        %1591 = vmatpush.msra.mxu0 0.0
        %1592 = vmatpush.msra.mxu0 0.0
        %1593 = vmatpush.msra.mxu0 %v1547
        %1594 = vmatpush.msra.mxu0 %v1546
        %1595 = vmatpush.msra.mxu0 %v1545
        %1596 = vmatpush.msra.mxu0 %v1544
        %1597 = vmatmul.f32.gmra.mxu0 %v1556
        %v1598 = vpop.f32.mrf.mxu0
        %v1599 = vadd.f32 %v1579, %v1598
        %1600 = vdwg.mxu0
        %1602 = vrot.lane.b32.xlu0 %v1576, 64
        %v1603 = vpop.permute.xlu0 %1602
        %v1604 = vsel %vm1324, %v1603, 0
        %v1606 = vsel %vm1324, %v1576, 0
        %1608 = vmatpush.xpose.msra.mxu0 0.0
        %1609 = vmatpush.xpose.msra.mxu0 0.0
        %1610 = vmatpush.xpose.msra.mxu0 0.0
        %1611 = vmatpush.xpose.msra.mxu0 0.0
        %1612 = vmatpush.xpose.msra.mxu0 0.0
        %1613 = vmatpush.xpose.msra.mxu0 0.0
        %1614 = vmatpush.xpose.msra.mxu0 0.0
        %1615 = vmatpush.xpose.msra.mxu0 0.0
        %1616 = vmatpush.xpose.msra.mxu0 0.0
        %1617 = vmatpush.xpose.msra.mxu0 0.0
        %1618 = vmatpush.xpose.msra.mxu0 0.0
        %1619 = vmatpush.xpose.msra.mxu0 0.0
        %1620 = vmatpush.xpose.msra.mxu0 0.0
        %1621 = vmatpush.xpose.msra.mxu0 0.0
        %1622 = vmatpush.xpose.msra.mxu0 0.0
        %1623 = vmatpush.xpose.msra.mxu0 %v1606
        %1624 = vmatmul.f32.gmra.mxu0 %v1604
        %v1625 = vpop.f32.mrf.mxu0
        %v1626 = vadd.f32 0.0, %v1625
        %1627 = vdwg.mxu0
        %v1628 = vmul.f32 %v1626, 0.25
        %v1629 = vsel %vm1350, %v1628, -inf
        %1630 = vmax.xlane.f32.xlu0 %v1629
        %v1631 = vpop.xlane.xlu0 %1630
        %v1632 = vsub.f32 %v1628, %v1631
        %v1633 = vmul.f32 %v1632, 1.442695
        %v1634 = vpow.pop %v1633
        %v1635 = vsel %vm1350, %v1634, 0.0
        %1636 = vadd.xlane.f32.xlu0 %v1635
        %v1637 = vpop.xlane.xlu0 %1636
        %v1638 = vrcp.pop %v1637
        %v1639 = vmul.f32 %v1634, %v1638
        %1640 = vrot.lane.b32.xlu0 %v1576, 96
        %v1641 = vpop.permute.xlu0 %1640
        %v1644 = vsel %vm1350, %v1639, 0
        %1646 = vmatpush.msra.mxu0 0.0
        %1647 = vmatpush.msra.mxu0 0.0
        %1648 = vmatpush.msra.mxu0 0.0
        %1649 = vmatpush.msra.mxu0 0.0
        %1650 = vmatpush.msra.mxu0 0.0
        %1651 = vmatpush.msra.mxu0 0.0
        %1652 = vmatpush.msra.mxu0 0.0
        %1653 = vmatpush.msra.mxu0 0.0
        %1654 = vmatpush.msra.mxu0 0.0
        %1655 = vmatpush.msra.mxu0 0.0
        %1656 = vmatpush.msra.mxu0 0.0
        %1657 = vmatpush.msra.mxu0 0.0
        %1658 = vmatpush.msra.mxu0 0.0
        %1659 = vmatpush.msra.mxu0 0.0
        %1660 = vmatpush.msra.mxu0 0.0
        %1661 = vmatpush.msra.mxu0 %v1641
        %1662 = vmatmul.f32.gmra.mxu0 %v1644
        %v1663 = vpop.f32.mrf.mxu0
        %v1664 = vadd.f32 0.0, %v1663
        %1665 = vdwg.mxu0
        %v1667 = vsel %vm1324, %v1664, 0
        %1669 = vmatpush.msra.mxu0 0.0
        %1670 = vmatpush.msra.mxu0 0.0
        %1671 = vmatpush.msra.mxu0 0.0
        %1672 = vmatpush.msra.mxu0 0.0
        %1673 = vmatpush.msra.mxu0 0.0
        %1674 = vmatpush.msra.mxu0 0.0
        %1675 = vmatpush.msra.mxu0 0.0
        %1676 = vmatpush.msra.mxu0 0.0
        %1677 = vmatpush.msra.mxu0 0.0
        %1678 = vmatpush.msra.mxu0 0.0
        %1679 = vmatpush.msra.mxu0 0.0
        %1680 = vmatpush.msra.mxu0 0.0
        %1681 = vmatpush.msra.mxu0 0.0
        %1682 = vmatpush.msra.mxu0 0.0
        %1683 = vmatpush.msra.mxu0 %v1549
        %1684 = vmatpush.msra.mxu0 %v1548
        %1685 = vmatmul.f32.gmra.mxu0 %v1667
        %v1686 = vpop.f32.mrf.mxu0
        %v1687 = vadd.f32 0.0, %v1686
        %1688 = vdwg.mxu0
        %v1689 = vadd.f32 %v1599, %v1687
        %1690 = vrot.lane.b32.xlu0 %v1576, 48
        %v1691 = vpop.permute.xlu0 %1690
        %1692 = vrot.lane.b32.xlu0 %v1576, 112
        %v1693 = vpop.permute.xlu0 %1692
        %v1694 = vsel %vm1324, %v1691, 0
        %v1696 = vsel %vm1324, %v1693, 0
        %1698 = vmatpush.xpose.msra.mxu0 0.0
        %1699 = vmatpush.xpose.msra.mxu0 0.0
        %1700 = vmatpush.xpose.msra.mxu0 0.0
        %1701 = vmatpush.xpose.msra.mxu0 0.0
        %1702 = vmatpush.xpose.msra.mxu0 0.0
        %1703 = vmatpush.xpose.msra.mxu0 0.0
        %1704 = vmatpush.xpose.msra.mxu0 0.0
        %1705 = vmatpush.xpose.msra.mxu0 0.0
        %1706 = vmatpush.xpose.msra.mxu0 0.0
        %1707 = vmatpush.xpose.msra.mxu0 0.0
        %1708 = vmatpush.xpose.msra.mxu0 0.0
        %1709 = vmatpush.xpose.msra.mxu0 0.0
        %1710 = vmatpush.xpose.msra.mxu0 0.0
        %1711 = vmatpush.xpose.msra.mxu0 0.0
        %1712 = vmatpush.xpose.msra.mxu0 0.0
        %1713 = vmatpush.xpose.msra.mxu0 %v1696
        %1714 = vmatmul.f32.gmra.mxu0 %v1694
        %v1715 = vpop.f32.mrf.mxu0
        %v1716 = vadd.f32 0.0, %v1715
        %1717 = vdwg.mxu0
        %v1718 = vmul.f32 %v1716, 0.25
        %v1719 = vsel %vm1350, %v1718, -inf
        %1720 = vmax.xlane.f32.xlu0 %v1719
        %v1721 = vpop.xlane.xlu0 %1720
        %v1722 = vsub.f32 %v1718, %v1721
        %v1723 = vmul.f32 %v1722, 1.442695
        %v1724 = vpow.pop %v1723
        %v1725 = vsel %vm1350, %v1724, 0.0
        %1726 = vadd.xlane.f32.xlu0 %v1725
        %v1727 = vpop.xlane.xlu0 %1726
        %v1728 = vrcp.pop %v1727
        %v1729 = vmul.f32 %v1724, %v1728
        %1730 = vrot.lane.b32.xlu0 %v1576, 80
        %v1731 = vpop.permute.xlu0 %1730
        %v1734 = vsel %vm1350, %v1729, 0
        %1736 = vmatpush.msra.mxu0 0.0
        %1737 = vmatpush.msra.mxu0 0.0
        %1738 = vmatpush.msra.mxu0 0.0
        %1739 = vmatpush.msra.mxu0 0.0
        %1740 = vmatpush.msra.mxu0 0.0
        %1741 = vmatpush.msra.mxu0 0.0
        %1742 = vmatpush.msra.mxu0 0.0
        %1743 = vmatpush.msra.mxu0 0.0
        %1744 = vmatpush.msra.mxu0 0.0
        %1745 = vmatpush.msra.mxu0 0.0
        %1746 = vmatpush.msra.mxu0 0.0
        %1747 = vmatpush.msra.mxu0 0.0
        %1748 = vmatpush.msra.mxu0 0.0
        %1749 = vmatpush.msra.mxu0 0.0
        %1750 = vmatpush.msra.mxu0 0.0
        %1751 = vmatpush.msra.mxu0 %v1731
        %1752 = vmatmul.f32.gmra.mxu0 %v1734
        %v1753 = vpop.f32.mrf.mxu0
        %v1754 = vadd.f32 0.0, %v1753
        %1755 = vdwg.mxu0
        %v1757 = vsel %vm1324, %v1754, 0
        %1759 = vmatpush.msra.mxu0 0.0
        %1760 = vmatpush.msra.mxu0 0.0
        %1761 = vmatpush.msra.mxu0 0.0
        %1762 = vmatpush.msra.mxu0 0.0
        %1763 = vmatpush.msra.mxu0 0.0
        %1764 = vmatpush.msra.mxu0 0.0
        %1765 = vmatpush.msra.mxu0 0.0
        %1766 = vmatpush.msra.mxu0 0.0
        %1767 = vmatpush.msra.mxu0 0.0
        %1768 = vmatpush.msra.mxu0 0.0
        %1769 = vmatpush.msra.mxu0 0.0
        %1770 = vmatpush.msra.mxu0 0.0
        %1771 = vmatpush.msra.mxu0 0.0
        %1772 = vmatpush.msra.mxu0 0.0
        %1773 = vmatpush.msra.mxu0 %v1551
        %1774 = vmatpush.msra.mxu0 %v1550
        %1775 = vmatmul.f32.gmra.mxu0 %v1757
        %v1776 = vpop.f32.mrf.mxu0
        %v1777 = vadd.f32 0.0, %v1776
        %1778 = vdwg.mxu0
        %v1779 = vadd.f32 %v1689, %v1777
        %v1780 = vadd.f32 %v1779, %v1539
        %v1781 = vsel %vm1099, %v1780, 0.0
        %1782 = vadd.xlane.f32.xlu0 %v1781
        %v1783 = vpop.xlane.xlu0 %1782
        %v1784 = vmul.f32 %v1783, %v1512
        %v1785 = vsub.f32 %v1780, %v1784
        %v1786 = vmul.f32 %v1785, %v1785
        %v1787 = vsel %vm1099, %v1786, 0.0
        %1788 = vadd.xlane.f32.xlu0 %v1787
        %v1789 = vpop.xlane.xlu0 %1788
        %v1790 = vmul.f32 %v1789, %v1512
        %v1791 = vadd.f32 %v1790, 1e-05
        %v1792 = vrsqrt.pop %v1791
        %v1793 = vmul.f32 %v1792, %v1791
        %v1794 = vmul.f32 %v1793, %v1792
        %v1795 = vmul.f32 0.5, %v1794
        %v1796 = vsub.f32 1.5, %v1795
        %v1797 = vmul.f32 %v1792, %v1796
        %vm1798 = vweird.f32 %v1791
        %vm1799 = vweird.f32 %v1792
        %vm1800 = vmor %vm1798, %vm1799
        %v1801 = vsel %vm1800, %v1792, %v1797
        %v1802 = vmul.f32 %v1785, %v1801
        %v1804 = vperm.slane %v1553, 0
        %v1806 = vmul.f32 %v1802, %v1804
        %v1808 = vperm.slane %v1554, 0
        %v1810 = vadd.f32 %v1806, %v1808
        %v1811 = vld [vmem:[#allocation20] sm:$0xff]
        %v1812 = vld [vmem:[#allocation20 + $0x8] sm:$0xff]
        %v1813 = vld [vmem:[#allocation20 + $0x10] sm:$0xff]
        %v1814 = vld [vmem:[#allocation20 + $0x18] sm:$0xff]
        %v1815 = vld [vmem:[%s26] sm:$0x1]
        %v1817 = vperm.slane %v1815, 0
        %v1820 = vsel %vm1099, %v1810, 0
        %1822 = vmatpush.msra.mxu0 0.0
        %1823 = vmatpush.msra.mxu0 0.0
        %1824 = vmatpush.msra.mxu0 0.0
        %1825 = vmatpush.msra.mxu0 0.0
        %1826 = vmatpush.msra.mxu0 0.0
        %1827 = vmatpush.msra.mxu0 0.0
        %1828 = vmatpush.msra.mxu0 0.0
        %1829 = vmatpush.msra.mxu0 0.0
        %1830 = vmatpush.msra.mxu0 0.0
        %1831 = vmatpush.msra.mxu0 0.0
        %1832 = vmatpush.msra.mxu0 0.0
        %1833 = vmatpush.msra.mxu0 0.0
        %1834 = vmatpush.msra.mxu0 %v1814
        %1835 = vmatpush.msra.mxu0 %v1813
        %1836 = vmatpush.msra.mxu0 %v1812
        %1837 = vmatpush.msra.mxu0 %v1811
        %1838 = vmatmul.f32.gmra.mxu0 %v1820
        %v1839 = vpop.f32.mrf.mxu0
        %v1840 = vadd.f32 %v1817, %v1839
        %1841 = vdwg.mxu0
        %vm1842 = vcmp.gt.f32.partialorder %v1840, 20.0
        %v1843 = vmin.f32 %v1840, 20.0
        %v1844 = vmul.f32 %v1843, 1.442695
        %v1845 = vpow.pop %v1844
        %v1846 = vadd.f32 %v1845, 1.0
        %v1847 = vlog2.pop %v1846
        %v1848 = vmul.f32 %v1847, 0.6931472
        %v1849 = vmul.f32 -0.5, %v1845
        %v1850 = vadd.f32 %v1849, 1.0
        %v1851 = vmul.f32 %v1850, %v1845
        %v1852 = vand.u32 2147483647, %v1845
        %vm1853 = vcmp.lt.f32.partialorder %v1852, 0.0004427343
        %v1854 = vsel %vm1853, %v1851, %v1848
        %v1855 = vsel %vm1842, %v1840, %v1854
        %v1856 = vlaneseq
        %v1857 = vand.u32 %v1856, 127
        %vm1858 = vcmp.ge.s32.totalorder %v1857, 64
        %v1859 = vsel %vm1858, %v1855, %v1840
        %1860 = vst [vmem:[%s1050] sm:$0xff] %v1859
        %s1861 = sand.u32 %s642, 1
        %s1862 = scalar_lea.sflag [#allocation4], %s1861
        %s1863 = sand.u32 %s642, 1
        %s1864 = smul.addr %s1863, 8
        %s1865 = scalar_lea.vmem [#allocation22], %s1864
        // Predicated region
        $region177: #{tpu_custom_call.1} parent=127 // pred_check
          %p1866 = pneg %p652
        $region178: #{tpu_custom_call.1} parent=127 // pred_check_branch
          %1868 = sbr.rel (%p1866) target = $region180
        $region179: #{tpu_custom_call.1} parent=127 // pred_region
          %1870 = vsyncadd %s1862, 0
          %s1871 = smul.addr %s52, 8
          %s1872 = scalar_lea.hbm %s27, %s1871
          %s1874 = sshll.u32 %s1865, 4
          %s1875 = int_to_ptr.vmem [resolvable:$true] %s1874
          %s1876 = sshll.u32 %s1872, 4
          %s1877 = int_to_ptr.hbm [resolvable:$true] %s1876
          %1879 = dma.vmem_to_hbm [thread:$0]  %s1875, 128, %s1877, %s1862
        $region180: #{tpu_custom_call.1} parent=127 // pred_fallthru
          _
      $region128: #{tpu_custom_call.1} parent=5 // pred_fallthru
        _
      %p1880 = scmp.le.s32.totalorder 2, %s47
      // Predicated region
      $region181: #{tpu_custom_call.1} parent=5 // pred_check
        %p1881 = pneg %p1880
      $region182: #{tpu_custom_call.1} parent=5 // pred_check_branch
        %1883 = sbr.rel (%p1881) target = $region184
      $region183: #{tpu_custom_call.1} parent=5 // pred_region
        %s1884 = ssub.s32 %s47, 2
        // Predicated region
        $region185: #{tpu_custom_call.1} parent=183 // pred_check
          %p1885 = pneg %p658
        $region186: #{tpu_custom_call.1} parent=183 // pred_check_branch
          %1887 = sbr.rel (%p1885) target = $region188
        $region187: #{tpu_custom_call.1} parent=183 // pred_region
          %s1888 = sand.u32 %s643, 1
          %s1889 = scalar_lea.sflag [#allocation4], %s1888
          %s1890 = sand.u32 %s643, 1
          %s1891 = smul.addr %s1890, 8
          %s1892 = scalar_lea.vmem [#allocation22], %s1891
          %1894 = dma.done %s1889, 128
        $region188: #{tpu_custom_call.1} parent=183 // pred_fallthru
          _
      $region184: #{tpu_custom_call.1} parent=5 // pred_fallthru
        _
    $region6: #{tpu_custom_call.1} parent=1 // loop_footer
      %s51 = sadd.s32 1, %s47
    $region7: #{tpu_custom_call.1} parent=1 // loop_footer_branch
      %46 = sbr.rel target = $region3
    $region8: #{tpu_custom_call.1} parent=1 // loop_exit
      _
    %1895 = vsyncpa [#allocation3], 1
    %s1896 = scalar_lea.sflag [#allocation3], 1
    %1897 = vsyncpa %s1896, 1
    %1898 = vsyncpa [#allocation6], 1
    %s1899 = scalar_lea.sflag [#allocation6], 1
    %1900 = vsyncpa %s1899, 1
    %1901 = vsyncpa [#allocation9], 1
    %1902 = vsyncpa [#allocation12], 1
    %1903 = vsyncpa [#allocation15], 1
    %1904 = vsyncpa [#allocation18], 1
    %1905 = vsyncpa [#allocation21], 1
    %1906 = vsyncpa [#allocation4], 1
    %s1907 = scalar_lea.sflag [#allocation4], 1
    %1908 = vsyncpa %s1907, 1

</llo_original>
